<compile_context>
chip_gen: v7x
topology: tpu7x:2x2x1
jax: 0.10.0
libtpu: 0.0.40
codegen_flags: <defaults>
</compile_context>

<pallas_src>
import functools

import jax
import jax.numpy as jnp
import numpy as np
from jax import lax
from jax.experimental import pallas as pl
from jax.experimental.pallas import tpu as pltpu


# ---------------------------------------------------------------------------
# Kernel helpers
# ---------------------------------------------------------------------------
def _layer_norm_f32(x, gamma, beta, eps=1e-5):
    """Single-pass LayerNorm over the last dim in float32 (E[x], E[x^2])."""
    mu = jnp.mean(x, axis=-1, keepdims=True)
    m2 = jnp.mean(x * x, axis=-1, keepdims=True)
    var = jnp.maximum(m2 - mu * mu, 0.0)
    return (x - mu) * lax.rsqrt(var + eps) * gamma + beta


# ---------------------------------------------------------------------------
# Kernel
# ---------------------------------------------------------------------------
def residual_attention_block_kernel(
    x_ref,                      # (1, Lp, D)  f32
    ln1_g_ref, ln1_b_ref,       # (1, D)      f32
    in_w_ref, in_b_ref,         # (H, D, 3hd) bf16 (Q scaled), (H, 1, 3hd) f32
    out_w_ref, out_b_ref,       # (H, hd, D)  bf16, (1, D) f32
    ln2_g_ref, ln2_b_ref,       # (1, D)      f32
    fc_w_ref, fc_b_ref,         # (C, D, ck)  bf16, (C, 1, ck) f32
    proj_w_ref, proj_b_ref,     # (C, ck, D)  bf16, (1, D) f32
    o_ref,                      # (1, Lp, D)  f32
    *, n_head, seq_len,
):
    f32, bf16 = jnp.float32, jnp.bfloat16
    x = x_ref[0].astype(f32)                 # (Lp, D)
    Lp, D = x.shape
    hd = D // n_head
    n_mlp_chunks = fc_w_ref.shape[0]

    # ---------------- ln_1 + multi-head self-attention (per-head loop) ----------------
    ln1 = _layer_norm_f32(x, ln1_g_ref[...], ln1_b_ref[...]).astype(bf16)

    if Lp != seq_len:
        key_ids = lax.broadcasted_iota(jnp.int32, (1, Lp), 1)
        key_bias = jnp.where(key_ids < seq_len, 0.0, -1e30).astype(f32)
    else:
        key_bias = None

    def head_body(h, acc):
        # Per-head QKV projection (1/H of the full projection FLOPs; no head-split transposes).
        qkv_h = jnp.dot(ln1, in_w_ref[h], preferred_element_type=f32) + in_b_ref[h]  # (Lp, 3hd)
        q_h = qkv_h[:, 0 * hd:1 * hd].astype(bf16)
        k_h = qkv_h[:, 1 * hd:2 * hd].astype(bf16)
        v_h = qkv_h[:, 2 * hd:3 * hd].astype(bf16)
        # scores = q @ k^T (contraction over the last dims; no materialized transpose)
        s = lax.dot_general(q_h, k_h, (((1,), (1,)), ((), ())),
                            preferred_element_type=f32)                              # (Lp, Lp)
        if key_bias is not None:
            s = s + key_bias                                                         # mask pad keys
        s = s - jnp.max(s, axis=-1, keepdims=True)
        p = jnp.exp(s)
        inv_denom = pl.reciprocal(jnp.sum(p, axis=-1, keepdims=True), approx=True)   # (Lp, 1)
        ctx = jnp.dot(p.astype(bf16), v_h, preferred_element_type=f32)               # (Lp, hd)
        # normalize the (Lp, hd) context instead of the (Lp, Lp) probabilities
        ctx = (ctx * inv_denom).astype(bf16)
        # fold this head's slice of the output projection (removes the head concat)
        return acc + jnp.dot(ctx, out_w_ref[h], preferred_element_type=f32)          # (Lp, D)

    attn = lax.fori_loop(0, n_head, head_body, jnp.zeros((Lp, D), f32))
    x = x + attn + out_b_ref[...]

    # ---------------- ln_2 + MLP (QuickGELU), hidden dim processed in chunks ----------------
    ln2 = _layer_norm_f32(x, ln2_g_ref[...], ln2_b_ref[...]).astype(bf16)

    def mlp_body(c, acc):
        h1 = jnp.dot(ln2, fc_w_ref[c], preferred_element_type=f32) + fc_b_ref[c]     # (Lp, ck)
        h1 = h1 * jax.nn.sigmoid(1.702 * h1)                                         # QuickGELU
        return acc + jnp.dot(h1.astype(bf16), proj_w_ref[c], preferred_element_type=f32)

    h2 = lax.fori_loop(0, n_mlp_chunks, mlp_body, jnp.zeros((Lp, D), f32))
    o_ref[0] = (x + h2 + proj_b_ref[...]).astype(o_ref.dtype)


# ---------------------------------------------------------------------------
# Wrapper
# ---------------------------------------------------------------------------
def _num_mlp_chunks(hidden, max_chunk=2048):
    """Number of hidden-dim chunks: each chunk a multiple of 128 lanes and <= max_chunk."""
    if hidden <= max_chunk:
        return 1
    for n in range(2, hidden + 1):
        ck = hidden // n
        if hidden % n == 0 and ck % 128 == 0 and ck <= max_chunk:
            return n
    return 1


def residual_attention_block(x_lnd, params, n_head):
    """x_lnd: (L, N, D) like PyTorch nn.MultiheadAttention (batch_first=False)."""
    L, N, D = x_lnd.shape
    assert D % n_head == 0
    hd = D // n_head
    hidden = 4 * D
    scale = 1.0 / float(np.sqrt(hd))
    f32, bf16 = jnp.float32, jnp.bfloat16

    # Pad the sequence dim to a multiple of 16 (bf16 sublane packing / unmasked stores).
    # Pad keys are masked in-kernel; pad rows are sliced off below.
    Lp = ((L + 15) // 16) * 16
    x_nld = jnp.transpose(x_lnd, (1, 0, 2)).astype(f32)
    if Lp != L:
        x_nld = jnp.pad(x_nld, ((0, 0), (0, Lp - L), (0, 0)))

    # --- reshape PyTorch weights into the per-head / per-chunk layouts the kernel indexes ---
    in_w_t = params["in_w"].T.astype(f32)    # (D, 3D): columns [q | k | v]
    in_b = params["in_b"].astype(f32)        # (3D,)
    # fold the 1/sqrt(hd) attention scale into the Q projection
    col_scale = jnp.concatenate([jnp.full((D,), scale, f32), jnp.ones((2 * D,), f32)])
    in_w_t = in_w_t * col_scale[None, :]
    in_b = in_b * col_scale

    def per_head_cols(w_cols):               # (D, D) -> (H, D, hd)
        return jnp.transpose(w_cols.reshape(D, n_head, hd), (1, 0, 2))

    in_w_heads = jnp.concatenate(
        [per_head_cols(in_w_t[:, 0 * D:1 * D]),
         per_head_cols(in_w_t[:, 1 * D:2 * D]),
         per_head_cols(in_w_t[:, 2 * D:3 * D])], axis=-1).astype(bf16)        # (H, D, 3hd)
    in_b_heads = jnp.concatenate(
        [in_b[0 * D:1 * D].reshape(n_head, 1, hd),
         in_b[1 * D:2 * D].reshape(n_head, 1, hd),
         in_b[2 * D:3 * D].reshape(n_head, 1, hd)], axis=-1).astype(f32)      # (H, 1, 3hd)

    out_w_heads = params["out_w"].T.reshape(n_head, hd, D).astype(bf16)       # (H, hd, D)

    n_chunks = _num_mlp_chunks(hidden)
    ck = hidden // n_chunks
    fc_w_c = jnp.transpose(params["fc_w"].T.reshape(D, n_chunks, ck),
                           (1, 0, 2)).astype(bf16)                            # (C, D, ck)
    fc_b_c = params["fc_b"].reshape(n_chunks, 1, ck).astype(f32)
    proj_w_c = params["proj_w"].T.reshape(n_chunks, ck, D).astype(bf16)       # (C, ck, D)

    args = (
        x_nld,
        params["ln1_g"].reshape(1, D).astype(f32), params["ln1_b"].reshape(1, D).astype(f32),
        in_w_heads, in_b_heads,
        out_w_heads, params["out_b"].reshape(1, D).astype(f32),
        params["ln2_g"].reshape(1, D).astype(f32), params["ln2_b"].reshape(1, D).astype(f32),
        fc_w_c, fc_b_c,
        proj_w_c, params["proj_b"].reshape(1, D).astype(f32),
    )

    # Generation-aware VMEM limit (~7/8 of capacity, capped at 100 MiB).
    try:
        vmem_cap = int(pltpu.get_tpu_info().vmem_capacity_bytes)
    except Exception:
        vmem_cap = 64 * 1024 * 1024
    vmem_limit = int(min(vmem_cap * 7 // 8, 100 * 1024 * 1024))

    # Advisory cost estimate (the D-contraction projections dominate: 24*D^2 FLOPs per token).
    flops = N * (24 * Lp * D * D + 4 * Lp * Lp * D)
    transcendentals = N * (n_head * Lp * Lp + Lp * hidden)
    weight_bytes = 12 * D * D * 2 + 13 * D * 4
    bytes_accessed = 2 * N * Lp * D * 4 + weight_bytes

    def run(single_buffer_weights):
        w_kwargs = dict(pipeline_mode=pl.Buffered(1)) if single_buffer_weights else {}

        def const_spec(shape):
            nd = len(shape)
            return pl.BlockSpec(shape, lambda b, _nd=nd: (0,) * _nd, **w_kwargs)

        in_specs = [
            pl.BlockSpec((1, Lp, D), lambda b: (b, 0, 0)),   # x: one batch element per grid step
            const_spec((1, D)), const_spec((1, D)),
            const_spec((n_head, D, 3 * hd)), const_spec((n_head, 1, 3 * hd)),
            const_spec((n_head, hd, D)), const_spec((1, D)),
            const_spec((1, D)), const_spec((1, D)),
            const_spec((n_chunks, D, ck)), const_spec((n_chunks, 1, ck)),
            const_spec((n_chunks, ck, D)), const_spec((1, D)),
        ]

        return pl.pallas_call(
            functools.partial(residual_attention_block_kernel, n_head=n_head, seq_len=L),
            out_shape=jax.ShapeDtypeStruct((N, Lp, D), f32),
            grid=(N,),
            in_specs=in_specs,
            out_specs=pl.BlockSpec((1, Lp, D), lambda b: (b, 0, 0)),
            compiler_params=pltpu.CompilerParams(
                dimension_semantics=("parallel",),
                vmem_limit_bytes=vmem_limit,
            ),
            cost_estimate=pl.CostEstimate(
                flops=flops,
                transcendentals=transcendentals,
                bytes_accessed=bytes_accessed,
            ),
        )(*args)

    try:
        out = run(single_buffer_weights=True)
    except Exception:
        # pl.Buffered(1) single-buffering not supported on this jax version — use defaults.
        out = run(single_buffer_weights=False)

    out = out[:, :L, :]
    return jnp.transpose(out, (1, 0, 2)).astype(x_lnd.dtype)


# ---------------------------------------------------------------------------
# Pure-JAX fp32 reference (mirrors PyTorch semantics) for a correctness check
# ---------------------------------------------------------------------------
def ref_forward(x_lnd, p, n_head):
    def ln(x, g, b):
        mu = x.mean(-1, keepdims=True)
        var = ((x - mu) ** 2).mean(-1, keepdims=True)
        return (x - mu) / jnp.sqrt(var + 1e-5) * g + b

    L, N, D = x_lnd.shape
    hd = D // n_head
    x = x_lnd.astype(jnp.float32)

    y = ln(x, p["ln1_g"], p["ln1_b"])
    qkv = y @ p["in_w"].T + p["in_b"]
    q, k, v = jnp.split(qkv, 3, axis=-1)

    def split_heads(t):   # (L, N, D) -> (N, H, L, hd)
        return jnp.transpose(t.reshape(L, N, n_head, hd), (1, 2, 0, 3))

    q, k, v = split_heads(q), split_heads(k), split_heads(v)
    s = jnp.einsum("nhqd,nhkd->nhqk", q, k) / jnp.sqrt(hd)
    a = jax.nn.softmax(s, axis=-1)
    o = jnp.einsum("nhqk,nhkd->nhqd", a, v)
    o = jnp.transpose(o, (2, 0, 1, 3)).reshape(L, N, D)
    o = o @ p["out_w"].T + p["out_b"]
    x = x + o

    y = ln(x, p["ln2_g"], p["ln2_b"])
    h = y @ p["fc_w"].T + p["fc_b"]
    h = h * jax.nn.sigmoid(1.702 * h)
    x = x + h @ p["proj_w"].T + p["proj_b"]
    return x


# ---------------------------------------------------------------------------
if __name__ == "__main__":
    L, N, D, H = 8, 2, 32, 4   # seq, batch, d_model, n_head

    key = jax.random.PRNGKey(0)
    ks = jax.random.split(key, 12)

    def rnd(k, shape, scale=0.1):
        return (scale * jax.random.normal(k, shape)).astype(jnp.float32)

    params = {
        "ln1_g": 1.0 + rnd(ks[0], (D,), 0.05),
        "ln1_b": rnd(ks[1], (D,), 0.05),
        "in_w": rnd(ks[2], (3 * D, D)),
        "in_b": rnd(ks[3], (3 * D,), 0.05),
        "out_w": rnd(ks[4], (D, D)),
        "out_b": rnd(ks[5], (D,), 0.05),
        "ln2_g": 1.0 + rnd(ks[6], (D,), 0.05),
        "ln2_b": rnd(ks[7], (D,), 0.05),
        "fc_w": rnd(ks[8], (4 * D, D)),
        "fc_b": rnd(ks[9], (4 * D,), 0.05),
        "proj_w": rnd(ks[10], (D, 4 * D)),
        "proj_b": rnd(ks[11], (D,), 0.05),
    }

    x = jax.random.normal(jax.random.PRNGKey(42), (L, N, D), dtype=jnp.float32)

    out = residual_attention_block(x, params, n_head=H)
    out = jax.block_until_ready(out)

    ref = jax.block_until_ready(ref_forward(x, params, H))
    # bf16 MXU operands (fp32 accumulation) + approx reciprocal => looser tolerance than fp32.
    np.testing.assert_allclose(np.asarray(out), np.asarray(ref), rtol=5e-2, atol=5e-2)

    print("KERNEL_OK")
</pallas_src>

<mosaic_0001>
module attributes {stable_mosaic.version = 11 : i64} {
  func.func @residual_attention_block_kernel(%arg0: i32, %arg1: memref<1x16x32xf32, #tpu.memory_space<vmem>>, %arg2: memref<1x32xf32, #tpu.memory_space<vmem>>, %arg3: memref<1x32xf32, #tpu.memory_space<vmem>>, %arg4: memref<4x32x24xbf16, #tpu.memory_space<vmem>>, %arg5: memref<4x1x24xf32, #tpu.memory_space<vmem>>, %arg6: memref<4x8x32xbf16, #tpu.memory_space<vmem>>, %arg7: memref<1x32xf32, #tpu.memory_space<vmem>>, %arg8: memref<1x32xf32, #tpu.memory_space<vmem>>, %arg9: memref<1x32xf32, #tpu.memory_space<vmem>>, %arg10: memref<1x32x128xbf16, #tpu.memory_space<vmem>>, %arg11: memref<1x1x128xf32, #tpu.memory_space<vmem>>, %arg12: memref<1x128x32xbf16, #tpu.memory_space<vmem>>, %arg13: memref<1x32xf32, #tpu.memory_space<vmem>>, %arg14: memref<1x16x32xf32, #tpu.memory_space<vmem>>) attributes {dimension_semantics = [#tpu.dimension_semantics<parallel>], iteration_bounds = array<i64: 2>, scalar_prefetch = 0 : i64, scratch_operands = 0 : i64, tpu.core_type = #tpu.core_type<tc>, window_params = [{transform_indices = @transform_0, window_bounds = array<i64: 1, 16, 32>}, {pipeline_mode = #tpu.pipeline_mode<synchronous>, transform_indices = @transform_1, window_bounds = array<i64: 1, 32>}, {pipeline_mode = #tpu.pipeline_mode<synchronous>, transform_indices = @transform_2, window_bounds = array<i64: 1, 32>}, {pipeline_mode = #tpu.pipeline_mode<synchronous>, transform_indices = @transform_3, window_bounds = array<i64: 4, 32, 24>}, {pipeline_mode = #tpu.pipeline_mode<synchronous>, transform_indices = @transform_4, window_bounds = array<i64: 4, 1, 24>}, {pipeline_mode = #tpu.pipeline_mode<synchronous>, transform_indices = @transform_5, window_bounds = array<i64: 4, 8, 32>}, {pipeline_mode = #tpu.pipeline_mode<synchronous>, transform_indices = @transform_6, window_bounds = array<i64: 1, 32>}, {pipeline_mode = #tpu.pipeline_mode<synchronous>, transform_indices = @transform_7, window_bounds = array<i64: 1, 32>}, {pipeline_mode = #tpu.pipeline_mode<synchronous>, transform_indices = @transform_8, window_bounds = array<i64: 1, 32>}, {pipeline_mode = #tpu.pipeline_mode<synchronous>, transform_indices = @transform_9, window_bounds = array<i64: 1, 32, 128>}, {pipeline_mode = #tpu.pipeline_mode<synchronous>, transform_indices = @transform_10, window_bounds = array<i64: 1, 1, 128>}, {pipeline_mode = #tpu.pipeline_mode<synchronous>, transform_indices = @transform_11, window_bounds = array<i64: 1, 128, 32>}, {pipeline_mode = #tpu.pipeline_mode<synchronous>, transform_indices = @transform_12, window_bounds = array<i64: 1, 32>}, {transform_indices = @transform_13, window_bounds = array<i64: 1, 16, 32>}]} {
    %c0 = arith.constant 0 : index
    %c0_0 = arith.constant 0 : index
    %c0_1 = arith.constant 0 : index
    %0 = vector.load %arg1[%c0, %c0_0, %c0_1] : memref<1x16x32xf32, #tpu.memory_space<vmem>>, vector<1x16x32xf32>
    %1 = vector.shape_cast %0 : vector<1x16x32xf32> to vector<16x32xf32>
    %c0_2 = arith.constant 0 : index
    %c0_3 = arith.constant 0 : index
    %2 = vector.load %arg2[%c0_2, %c0_3] : memref<1x32xf32, #tpu.memory_space<vmem>>, vector<1x32xf32>
    %c0_4 = arith.constant 0 : index
    %c0_5 = arith.constant 0 : index
    %3 = vector.load %arg3[%c0_4, %c0_5] : memref<1x32xf32, #tpu.memory_space<vmem>>, vector<1x32xf32>
    %cst = arith.constant dense<0.000000e+00> : vector<16xf32>
    %4 = vector.multi_reduction <add>, %1, %cst [1] : vector<16x32xf32> to vector<16xf32>
    %5 = vector.shape_cast %4 : vector<16xf32> to vector<16x1xf32>
    %cst_6 = arith.constant 3.200000e+01 : f32
    %6 = vector.broadcast %cst_6 : f32 to vector<16x1xf32>
    %7 = arith.divf %5, %6 : vector<16x1xf32>
    %8 = arith.mulf %1, %1 : vector<16x32xf32>
    %cst_7 = arith.constant dense<0.000000e+00> : vector<16xf32>
    %9 = vector.multi_reduction <add>, %8, %cst_7 [1] : vector<16x32xf32> to vector<16xf32>
    %10 = vector.shape_cast %9 : vector<16xf32> to vector<16x1xf32>
    %cst_8 = arith.constant 3.200000e+01 : f32
    %11 = vector.broadcast %cst_8 : f32 to vector<16x1xf32>
    %12 = arith.divf %10, %11 : vector<16x1xf32>
    %13 = arith.mulf %7, %7 : vector<16x1xf32>
    %14 = arith.subf %12, %13 : vector<16x1xf32>
    %cst_9 = arith.constant 0.000000e+00 : f32
    %15 = vector.broadcast %cst_9 : f32 to vector<16x1xf32>
    %16 = arith.maximumf %14, %15 : vector<16x1xf32>
    %17 = vector.broadcast %7 : vector<16x1xf32> to vector<16x32xf32>
    %18 = arith.subf %1, %17 : vector<16x32xf32>
    %cst_10 = arith.constant 9.99999974E-6 : f32
    %19 = vector.broadcast %cst_10 : f32 to vector<16x1xf32>
    %20 = arith.addf %16, %19 : vector<16x1xf32>
    %21 = math.rsqrt %20 : vector<16x1xf32>
    %22 = vector.broadcast %21 : vector<16x1xf32> to vector<16x32xf32>
    %23 = arith.mulf %18, %22 : vector<16x32xf32>
    %24 = vector.broadcast %2 : vector<1x32xf32> to vector<16x32xf32>
    %25 = arith.mulf %23, %24 : vector<16x32xf32>
    %26 = vector.broadcast %3 : vector<1x32xf32> to vector<16x32xf32>
    %27 = arith.addf %25, %26 : vector<16x32xf32>
    %28 = arith.truncf %27 : vector<16x32xf32> to vector<16x32xbf16>
    %29 = tpu.iota {dimensions = array<i32: 1>} : vector<1x16xi32>
    %c8_i32 = arith.constant 8 : i32
    %30 = vector.broadcast %c8_i32 : i32 to vector<1x16xi32>
    %31 = arith.cmpi slt, %29, %30 : vector<1x16xi32>
    %cst_11 = arith.constant 0.000000e+00 : f32
    %cst_12 = arith.constant -1.000000e+30 : f32
    %32 = vector.broadcast %cst_11 : f32 to vector<1x16xf32>
    %33 = vector.broadcast %cst_12 : f32 to vector<1x16xf32>
    %34 = arith.select %31, %32, %33 : vector<1x16xi1>, vector<1x16xf32>
    %cst_13 = arith.constant 0.000000e+00 : f32
    %35 = vector.broadcast %cst_13 : f32 to vector<16x32xf32>
    %c0_i32 = arith.constant 0 : i32
    %c4_i32 = arith.constant 4 : i32
    %36 = arith.addi %c0_i32, %c4_i32 : i32
    %c1_i32 = arith.constant 1 : i32
    %37 = scf.for %arg15 = %c0_i32 to %36 step %c1_i32 iter_args(%arg16 = %35) -> (vector<16x32xf32>)  : i32 {
      %100 = arith.index_cast %arg15 : i32 to index
      %c0_45 = arith.constant 0 : index
      %c0_46 = arith.constant 0 : index
      %101 = vector.load %arg4[%100, %c0_45, %c0_46] : memref<4x32x24xbf16, #tpu.memory_space<vmem>>, vector<1x32x24xbf16>
      %102 = vector.shape_cast %101 : vector<1x32x24xbf16> to vector<32x24xbf16>
      %cst_47 = arith.constant dense<0.000000e+00> : vector<16x24xf32>
      %103 = tpu.matmul %28, %102, %cst_47 {dimension_numbers = #tpu.dot_dimension_numbers<[1], [0], [0], [1], [0, 0, 1, 1], [], []>} : vector<16x32xbf16>, vector<32x24xbf16>, vector<16x24xf32> -> vector<16x24xf32>
      %104 = arith.index_cast %arg15 : i32 to index
      %c0_48 = arith.constant 0 : index
      %c0_49 = arith.constant 0 : index
      %105 = vector.load %arg5[%104, %c0_48, %c0_49] : memref<4x1x24xf32, #tpu.memory_space<vmem>>, vector<1x1x24xf32>
      %106 = vector.shape_cast %105 : vector<1x1x24xf32> to vector<1x24xf32>
      %107 = vector.broadcast %106 : vector<1x24xf32> to vector<16x24xf32>
      %108 = arith.addf %103, %107 : vector<16x24xf32>
      %109 = vector.extract_strided_slice %108 {offsets = [0, 0], sizes = [16, 8], strides = [1, 1]} : vector<16x24xf32> to vector<16x8xf32>
      %110 = arith.truncf %109 : vector<16x8xf32> to vector<16x8xbf16>
      %111 = vector.extract_strided_slice %108 {offsets = [0, 8], sizes = [16, 8], strides = [1, 1]} : vector<16x24xf32> to vector<16x8xf32>
      %112 = arith.truncf %111 : vector<16x8xf32> to vector<16x8xbf16>
      %113 = vector.extract_strided_slice %108 {offsets = [0, 16], sizes = [16, 8], strides = [1, 1]} : vector<16x24xf32> to vector<16x8xf32>
      %114 = arith.truncf %113 : vector<16x8xf32> to vector<16x8xbf16>
      %cst_50 = arith.constant dense<0.000000e+00> : vector<16x16xf32>
      %115 = tpu.matmul %110, %112, %cst_50 {dimension_numbers = #tpu.dot_dimension_numbers<[1], [1], [0], [0], [0, 0, 1, 0], [], []>} : vector<16x8xbf16>, vector<16x8xbf16>, vector<16x16xf32> -> vector<16x16xf32>
      %116 = vector.broadcast %34 : vector<1x16xf32> to vector<16x16xf32>
      %117 = arith.addf %115, %116 : vector<16x16xf32>
      %cst_51 = arith.constant dense<0xFF800000> : vector<16xf32>
      %118 = vector.multi_reduction <maximumf>, %117, %cst_51 [1] : vector<16x16xf32> to vector<16xf32>
      %119 = vector.shape_cast %118 : vector<16xf32> to vector<16x1xf32>
      %120 = vector.broadcast %119 : vector<16x1xf32> to vector<16x16xf32>
      %121 = arith.subf %117, %120 : vector<16x16xf32>
      %122 = math.exp %121 : vector<16x16xf32>
      %cst_52 = arith.constant dense<0.000000e+00> : vector<16xf32>
      %123 = vector.multi_reduction <add>, %122, %cst_52 [1] : vector<16x16xf32> to vector<16xf32>
      %124 = vector.shape_cast %123 : vector<16xf32> to vector<16x1xf32>
      %125 = tpu.reciprocal %124 {approx = true} : vector<16x1xf32> -> vector<16x1xf32>
      %126 = arith.truncf %122 : vector<16x16xf32> to vector<16x16xbf16>
      %cst_53 = arith.constant dense<0.000000e+00> : vector<16x8xf32>
      %127 = tpu.matmul %126, %114, %cst_53 {dimension_numbers = #tpu.dot_dimension_numbers<[1], [0], [0], [1], [0, 0, 1, 1], [], []>} : vector<16x16xbf16>, vector<16x8xbf16>, vector<16x8xf32> -> vector<16x8xf32>
      %128 = vector.broadcast %125 : vector<16x1xf32> to vector<16x8xf32>
      %129 = arith.mulf %127, %128 : vector<16x8xf32>
      %130 = arith.truncf %129 : vector<16x8xf32> to vector<16x8xbf16>
      %131 = arith.index_cast %arg15 : i32 to index
      %c0_54 = arith.constant 0 : index
      %c0_55 = arith.constant 0 : index
      %132 = vector.load %arg6[%131, %c0_54, %c0_55] : memref<4x8x32xbf16, #tpu.memory_space<vmem>>, vector<1x8x32xbf16>
      %133 = vector.shape_cast %132 : vector<1x8x32xbf16> to vector<8x32xbf16>
      %cst_56 = arith.constant dense<0.000000e+00> : vector<16x32xf32>
      %134 = tpu.matmul %130, %133, %cst_56 {dimension_numbers = #tpu.dot_dimension_numbers<[1], [0], [0], [1], [0, 0, 1, 1], [], []>} : vector<16x8xbf16>, vector<8x32xbf16>, vector<16x32xf32> -> vector<16x32xf32>
      %135 = arith.addf %arg16, %134 : vector<16x32xf32>
      scf.yield %135 : vector<16x32xf32>
    }
    %c4_i32_14 = arith.constant 4 : i32
    %38 = arith.addf %1, %37 : vector<16x32xf32>
    %c0_15 = arith.constant 0 : index
    %c0_16 = arith.constant 0 : index
    %39 = vector.load %arg7[%c0_15, %c0_16] : memref<1x32xf32, #tpu.memory_space<vmem>>, vector<1x32xf32>
    %40 = vector.broadcast %39 : vector<1x32xf32> to vector<16x32xf32>
    %41 = arith.addf %38, %40 : vector<16x32xf32>
    %c0_17 = arith.constant 0 : index
    %c0_18 = arith.constant 0 : index
    %42 = vector.load %arg8[%c0_17, %c0_18] : memref<1x32xf32, #tpu.memory_space<vmem>>, vector<1x32xf32>
    %c0_19 = arith.constant 0 : index
    %c0_20 = arith.constant 0 : index
    %43 = vector.load %arg9[%c0_19, %c0_20] : memref<1x32xf32, #tpu.memory_space<vmem>>, vector<1x32xf32>
    %cst_21 = arith.constant dense<0.000000e+00> : vector<16xf32>
    %44 = vector.multi_reduction <add>, %41, %cst_21 [1] : vector<16x32xf32> to vector<16xf32>
    %45 = vector.shape_cast %44 : vector<16xf32> to vector<16x1xf32>
    %cst_22 = arith.constant 3.200000e+01 : f32
    %46 = vector.broadcast %cst_22 : f32 to vector<16x1xf32>
    %47 = arith.divf %45, %46 : vector<16x1xf32>
    %48 = arith.mulf %41, %41 : vector<16x32xf32>
    %cst_23 = arith.constant dense<0.000000e+00> : vector<16xf32>
    %49 = vector.multi_reduction <add>, %48, %cst_23 [1] : vector<16x32xf32> to vector<16xf32>
    %50 = vector.shape_cast %49 : vector<16xf32> to vector<16x1xf32>
    %cst_24 = arith.constant 3.200000e+01 : f32
    %51 = vector.broadcast %cst_24 : f32 to vector<16x1xf32>
    %52 = arith.divf %50, %51 : vector<16x1xf32>
    %53 = arith.mulf %47, %47 : vector<16x1xf32>
    %54 = arith.subf %52, %53 : vector<16x1xf32>
    %cst_25 = arith.constant 0.000000e+00 : f32
    %55 = vector.broadcast %cst_25 : f32 to vector<16x1xf32>
    %56 = arith.maximumf %54, %55 : vector<16x1xf32>
    %57 = vector.broadcast %47 : vector<16x1xf32> to vector<16x32xf32>
    %58 = arith.subf %41, %57 : vector<16x32xf32>
    %cst_26 = arith.constant 9.99999974E-6 : f32
    %59 = vector.broadcast %cst_26 : f32 to vector<16x1xf32>
    %60 = arith.addf %56, %59 : vector<16x1xf32>
    %61 = math.rsqrt %60 : vector<16x1xf32>
    %62 = vector.broadcast %61 : vector<16x1xf32> to vector<16x32xf32>
    %63 = arith.mulf %58, %62 : vector<16x32xf32>
    %64 = vector.broadcast %42 : vector<1x32xf32> to vector<16x32xf32>
    %65 = arith.mulf %63, %64 : vector<16x32xf32>
    %66 = vector.broadcast %43 : vector<1x32xf32> to vector<16x32xf32>
    %67 = arith.addf %65, %66 : vector<16x32xf32>
    %68 = arith.truncf %67 : vector<16x32xf32> to vector<16x32xbf16>
    %cst_27 = arith.constant 0.000000e+00 : f32
    %69 = vector.broadcast %cst_27 : f32 to vector<16x32xf32>
    %c0_i32_28 = arith.constant 0 : i32
    %70 = arith.index_cast %c0_i32_28 : i32 to index
    %c0_29 = arith.constant 0 : index
    %c0_30 = arith.constant 0 : index
    %71 = vector.load %arg10[%70, %c0_29, %c0_30] : memref<1x32x128xbf16, #tpu.memory_space<vmem>>, vector<1x32x128xbf16>
    %72 = vector.shape_cast %71 : vector<1x32x128xbf16> to vector<32x128xbf16>
    %cst_31 = arith.constant dense<0.000000e+00> : vector<16x128xf32>
    %73 = tpu.matmul %68, %72, %cst_31 {dimension_numbers = #tpu.dot_dimension_numbers<[1], [0], [0], [1], [0, 0, 1, 1], [], []>} : vector<16x32xbf16>, vector<32x128xbf16>, vector<16x128xf32> -> vector<16x128xf32>
    %74 = arith.index_cast %c0_i32_28 : i32 to index
    %c0_32 = arith.constant 0 : index
    %c0_33 = arith.constant 0 : index
    %75 = vector.load %arg11[%74, %c0_32, %c0_33] : memref<1x1x128xf32, #tpu.memory_space<vmem>>, vector<1x1x128xf32>
    %76 = vector.shape_cast %75 : vector<1x1x128xf32> to vector<1x128xf32>
    %77 = vector.broadcast %76 : vector<1x128xf32> to vector<16x128xf32>
    %78 = arith.addf %73, %77 : vector<16x128xf32>
    %cst_34 = arith.constant 1.702000e+00 : f32
    %79 = vector.broadcast %cst_34 : f32 to vector<16x128xf32>
    %80 = arith.mulf %79, %78 : vector<16x128xf32>
    %81 = arith.negf %80 : vector<16x128xf32>
    %82 = math.exp %81 : vector<16x128xf32>
    %cst_35 = arith.constant 1.000000e+00 : f32
    %83 = vector.broadcast %cst_35 : f32 to vector<16x128xf32>
    %84 = arith.addf %83, %82 : vector<16x128xf32>
    %85 = arith.divf %83, %84 : vector<16x128xf32>
    %86 = arith.mulf %78, %85 : vector<16x128xf32>
    %87 = arith.truncf %86 : vector<16x128xf32> to vector<16x128xbf16>
    %88 = arith.index_cast %c0_i32_28 : i32 to index
    %c0_36 = arith.constant 0 : index
    %c0_37 = arith.constant 0 : index
    %89 = vector.load %arg12[%88, %c0_36, %c0_37] : memref<1x128x32xbf16, #tpu.memory_space<vmem>>, vector<1x128x32xbf16>
    %90 = vector.shape_cast %89 : vector<1x128x32xbf16> to vector<128x32xbf16>
    %cst_38 = arith.constant dense<0.000000e+00> : vector<16x32xf32>
    %91 = tpu.matmul %87, %90, %cst_38 {dimension_numbers = #tpu.dot_dimension_numbers<[1], [0], [0], [1], [0, 0, 1, 1], [], []>} : vector<16x128xbf16>, vector<128x32xbf16>, vector<16x32xf32> -> vector<16x32xf32>
    %92 = arith.addf %69, %91 : vector<16x32xf32>
    %c1_i32_39 = arith.constant 1 : i32
    %93 = arith.addf %41, %92 : vector<16x32xf32>
    %c0_40 = arith.constant 0 : index
    %c0_41 = arith.constant 0 : index
    %94 = vector.load %arg13[%c0_40, %c0_41] : memref<1x32xf32, #tpu.memory_space<vmem>>, vector<1x32xf32>
    %95 = vector.broadcast %94 : vector<1x32xf32> to vector<16x32xf32>
    %96 = arith.addf %93, %95 : vector<16x32xf32>
    %c0_42 = arith.constant 0 : index
    %c0_43 = arith.constant 0 : index
    %c0_44 = arith.constant 0 : index
    %97 = vector.load %arg14[%c0_42, %c0_43, %c0_44] : memref<1x16x32xf32, #tpu.memory_space<vmem>>, vector<1x16x32xf32>
    %98 = vector.shape_cast %97 : vector<1x16x32xf32> to vector<16x32xf32>
    %99 = vector.shape_cast %96 : vector<16x32xf32> to vector<1x16x32xf32>
    tpu.vector_store %arg14[%c0_42, %c0_43, %c0_44], %99 {strides = array<i32>} : memref<1x16x32xf32, #tpu.memory_space<vmem>>, vector<1x16x32xf32>,
    return
  }
  func.func @transform_0(%arg0: i32) -> (i32, i32, i32) {
    %c0_i32 = arith.constant 0 : i32
    %c0_i32_0 = arith.constant 0 : i32
    %c0_i32_1 = arith.constant 0 : i32
    return %arg0, %c0_i32, %c0_i32_0 : i32, i32, i32
  }
  func.func @transform_1(%arg0: i32) -> (i32, i32) {
    %c0_i32 = arith.constant 0 : i32
    %c0_i32_0 = arith.constant 0 : i32
    %c0_i32_1 = arith.constant 0 : i32
    return %c0_i32, %c0_i32_0 : i32, i32
  }
  func.func @transform_2(%arg0: i32) -> (i32, i32) {
    %c0_i32 = arith.constant 0 : i32
    %c0_i32_0 = arith.constant 0 : i32
    %c0_i32_1 = arith.constant 0 : i32
    return %c0_i32, %c0_i32_0 : i32, i32
  }
  func.func @transform_3(%arg0: i32) -> (i32, i32, i32) {
    %c0_i32 = arith.constant 0 : i32
    %c0_i32_0 = arith.constant 0 : i32
    %c0_i32_1 = arith.constant 0 : i32
    %c0_i32_2 = arith.constant 0 : i32
    return %c0_i32, %c0_i32_0, %c0_i32_1 : i32, i32, i32
  }
  func.func @transform_4(%arg0: i32) -> (i32, i32, i32) {
    %c0_i32 = arith.constant 0 : i32
    %c0_i32_0 = arith.constant 0 : i32
    %c0_i32_1 = arith.constant 0 : i32
    %c0_i32_2 = arith.constant 0 : i32
    return %c0_i32, %c0_i32_0, %c0_i32_1 : i32, i32, i32
  }
  func.func @transform_5(%arg0: i32) -> (i32, i32, i32) {
    %c0_i32 = arith.constant 0 : i32
    %c0_i32_0 = arith.constant 0 : i32
    %c0_i32_1 = arith.constant 0 : i32
    %c0_i32_2 = arith.constant 0 : i32
    return %c0_i32, %c0_i32_0, %c0_i32_1 : i32, i32, i32
  }
  func.func @transform_6(%arg0: i32) -> (i32, i32) {
    %c0_i32 = arith.constant 0 : i32
    %c0_i32_0 = arith.constant 0 : i32
    %c0_i32_1 = arith.constant 0 : i32
    return %c0_i32, %c0_i32_0 : i32, i32
  }
  func.func @transform_7(%arg0: i32) -> (i32, i32) {
    %c0_i32 = arith.constant 0 : i32
    %c0_i32_0 = arith.constant 0 : i32
    %c0_i32_1 = arith.constant 0 : i32
    return %c0_i32, %c0_i32_0 : i32, i32
  }
  func.func @transform_8(%arg0: i32) -> (i32, i32) {
    %c0_i32 = arith.constant 0 : i32
    %c0_i32_0 = arith.constant 0 : i32
    %c0_i32_1 = arith.constant 0 : i32
    return %c0_i32, %c0_i32_0 : i32, i32
  }
  func.func @transform_9(%arg0: i32) -> (i32, i32, i32) {
    %c0_i32 = arith.constant 0 : i32
    %c0_i32_0 = arith.constant 0 : i32
    %c0_i32_1 = arith.constant 0 : i32
    %c0_i32_2 = arith.constant 0 : i32
    return %c0_i32, %c0_i32_0, %c0_i32_1 : i32, i32, i32
  }
  func.func @transform_10(%arg0: i32) -> (i32, i32, i32) {
    %c0_i32 = arith.constant 0 : i32
    %c0_i32_0 = arith.constant 0 : i32
    %c0_i32_1 = arith.constant 0 : i32
    %c0_i32_2 = arith.constant 0 : i32
    return %c0_i32, %c0_i32_0, %c0_i32_1 : i32, i32, i32
  }
  func.func @transform_11(%arg0: i32) -> (i32, i32, i32) {
    %c0_i32 = arith.constant 0 : i32
    %c0_i32_0 = arith.constant 0 : i32
    %c0_i32_1 = arith.constant 0 : i32
    %c0_i32_2 = arith.constant 0 : i32
    return %c0_i32, %c0_i32_0, %c0_i32_1 : i32, i32, i32
  }
  func.func @transform_12(%arg0: i32) -> (i32, i32) {
    %c0_i32 = arith.constant 0 : i32
    %c0_i32_0 = arith.constant 0 : i32
    %c0_i32_1 = arith.constant 0 : i32
    return %c0_i32, %c0_i32_0 : i32, i32
  }
  func.func @transform_13(%arg0: i32) -> (i32, i32, i32) {
    %c0_i32 = arith.constant 0 : i32
    %c0_i32_0 = arith.constant 0 : i32
    %c0_i32_1 = arith.constant 0 : i32
    return %arg0, %c0_i32, %c0_i32_0 : i32, i32, i32
  }
}

module attributes {stable_mosaic.version = 11 : i64} {
  func.func @residual_attention_block_kernel(%arg0: i32, %arg1: memref<1x16x32xf32, #tpu.memory_space<vmem>>, %arg2: memref<1x32xf32, #tpu.memory_space<vmem>>, %arg3: memref<1x32xf32, #tpu.memory_space<vmem>>, %arg4: memref<4x32x24xbf16, #tpu.memory_space<vmem>>, %arg5: memref<4x1x24xf32, #tpu.memory_space<vmem>>, %arg6: memref<4x8x32xbf16, #tpu.memory_space<vmem>>, %arg7: memref<1x32xf32, #tpu.memory_space<vmem>>, %arg8: memref<1x32xf32, #tpu.memory_space<vmem>>, %arg9: memref<1x32xf32, #tpu.memory_space<vmem>>, %arg10: memref<1x32x128xbf16, #tpu.memory_space<vmem>>, %arg11: memref<1x1x128xf32, #tpu.memory_space<vmem>>, %arg12: memref<1x128x32xbf16, #tpu.memory_space<vmem>>, %arg13: memref<1x32xf32, #tpu.memory_space<vmem>>, %arg14: memref<1x16x32xf32, #tpu.memory_space<vmem>>) attributes {dimension_semantics = [#tpu.dimension_semantics<parallel>], iteration_bounds = array<i64: 2>, scalar_prefetch = 0 : i64, scratch_operands = 0 : i64, tpu.core_type = #tpu.core_type<tc>, window_params = [{transform_indices = @transform_0, window_bounds = array<i64: 1, 16, 32>}, {pipeline_mode = #tpu.pipeline_mode<synchronous>, transform_indices = @transform_1, window_bounds = array<i64: 1, 32>}, {pipeline_mode = #tpu.pipeline_mode<synchronous>, transform_indices = @transform_2, window_bounds = array<i64: 1, 32>}, {pipeline_mode = #tpu.pipeline_mode<synchronous>, transform_indices = @transform_3, window_bounds = array<i64: 4, 32, 24>}, {pipeline_mode = #tpu.pipeline_mode<synchronous>, transform_indices = @transform_4, window_bounds = array<i64: 4, 1, 24>}, {pipeline_mode = #tpu.pipeline_mode<synchronous>, transform_indices = @transform_5, window_bounds = array<i64: 4, 8, 32>}, {pipeline_mode = #tpu.pipeline_mode<synchronous>, transform_indices = @transform_6, window_bounds = array<i64: 1, 32>}, {pipeline_mode = #tpu.pipeline_mode<synchronous>, transform_indices = @transform_7, window_bounds = array<i64: 1, 32>}, {pipeline_mode = #tpu.pipeline_mode<synchronous>, transform_indices = @transform_8, window_bounds = array<i64: 1, 32>}, {pipeline_mode = #tpu.pipeline_mode<synchronous>, transform_indices = @transform_9, window_bounds = array<i64: 1, 32, 128>}, {pipeline_mode = #tpu.pipeline_mode<synchronous>, transform_indices = @transform_10, window_bounds = array<i64: 1, 1, 128>}, {pipeline_mode = #tpu.pipeline_mode<synchronous>, transform_indices = @transform_11, window_bounds = array<i64: 1, 128, 32>}, {pipeline_mode = #tpu.pipeline_mode<synchronous>, transform_indices = @transform_12, window_bounds = array<i64: 1, 32>}, {transform_indices = @transform_13, window_bounds = array<i64: 1, 16, 32>}]} {
    %c0 = arith.constant 0 : index
    %c0_0 = arith.constant 0 : index
    %c0_1 = arith.constant 0 : index
    %0 = vector.load %arg1[%c0, %c0_0, %c0_1] : memref<1x16x32xf32, #tpu.memory_space<vmem>>, vector<1x16x32xf32>
    %1 = vector.shape_cast %0 : vector<1x16x32xf32> to vector<16x32xf32>
    %c0_2 = arith.constant 0 : index
    %c0_3 = arith.constant 0 : index
    %2 = vector.load %arg2[%c0_2, %c0_3] : memref<1x32xf32, #tpu.memory_space<vmem>>, vector<1x32xf32>
    %c0_4 = arith.constant 0 : index
    %c0_5 = arith.constant 0 : index
    %3 = vector.load %arg3[%c0_4, %c0_5] : memref<1x32xf32, #tpu.memory_space<vmem>>, vector<1x32xf32>
    %cst = arith.constant dense<0.000000e+00> : vector<16xf32>
    %4 = vector.multi_reduction <add>, %1, %cst [1] : vector<16x32xf32> to vector<16xf32>
    %5 = vector.shape_cast %4 : vector<16xf32> to vector<16x1xf32>
    %cst_6 = arith.constant 3.200000e+01 : f32
    %6 = vector.broadcast %cst_6 : f32 to vector<16x1xf32>
    %7 = arith.divf %5, %6 : vector<16x1xf32>
    %8 = arith.mulf %1, %1 : vector<16x32xf32>
    %cst_7 = arith.constant dense<0.000000e+00> : vector<16xf32>
    %9 = vector.multi_reduction <add>, %8, %cst_7 [1] : vector<16x32xf32> to vector<16xf32>
    %10 = vector.shape_cast %9 : vector<16xf32> to vector<16x1xf32>
    %cst_8 = arith.constant 3.200000e+01 : f32
    %11 = vector.broadcast %cst_8 : f32 to vector<16x1xf32>
    %12 = arith.divf %10, %11 : vector<16x1xf32>
    %13 = arith.mulf %7, %7 : vector<16x1xf32>
    %14 = arith.subf %12, %13 : vector<16x1xf32>
    %cst_9 = arith.constant 0.000000e+00 : f32
    %15 = vector.broadcast %cst_9 : f32 to vector<16x1xf32>
    %16 = arith.maximumf %14, %15 : vector<16x1xf32>
    %17 = vector.broadcast %7 : vector<16x1xf32> to vector<16x32xf32>
    %18 = arith.subf %1, %17 : vector<16x32xf32>
    %cst_10 = arith.constant 9.99999974E-6 : f32
    %19 = vector.broadcast %cst_10 : f32 to vector<16x1xf32>
    %20 = arith.addf %16, %19 : vector<16x1xf32>
    %21 = math.rsqrt %20 : vector<16x1xf32>
    %22 = vector.broadcast %21 : vector<16x1xf32> to vector<16x32xf32>
    %23 = arith.mulf %18, %22 : vector<16x32xf32>
    %24 = vector.broadcast %2 : vector<1x32xf32> to vector<16x32xf32>
    %25 = arith.mulf %23, %24 : vector<16x32xf32>
    %26 = vector.broadcast %3 : vector<1x32xf32> to vector<16x32xf32>
    %27 = arith.addf %25, %26 : vector<16x32xf32>
    %28 = arith.truncf %27 : vector<16x32xf32> to vector<16x32xbf16>
    %29 = tpu.iota {dimensions = array<i32: 1>} : vector<1x16xi32>
    %c8_i32 = arith.constant 8 : i32
    %30 = vector.broadcast %c8_i32 : i32 to vector<1x16xi32>
    %31 = arith.cmpi slt, %29, %30 : vector<1x16xi32>
    %cst_11 = arith.constant 0.000000e+00 : f32
    %cst_12 = arith.constant -1.000000e+30 : f32
    %32 = vector.broadcast %cst_11 : f32 to vector<1x16xf32>
    %33 = vector.broadcast %cst_12 : f32 to vector<1x16xf32>
    %34 = arith.select %31, %32, %33 : vector<1x16xi1>, vector<1x16xf32>
    %cst_13 = arith.constant 0.000000e+00 : f32
    %35 = vector.broadcast %cst_13 : f32 to vector<16x32xf32>
    %c0_i32 = arith.constant 0 : i32
    %c4_i32 = arith.constant 4 : i32
    %36 = arith.addi %c0_i32, %c4_i32 : i32
    %c1_i32 = arith.constant 1 : i32
    %37 = scf.for %arg15 = %c0_i32 to %36 step %c1_i32 iter_args(%arg16 = %35) -> (vector<16x32xf32>)  : i32 {
      %100 = arith.index_cast %arg15 : i32 to index
      %c0_45 = arith.constant 0 : index
      %c0_46 = arith.constant 0 : index
      %101 = vector.load %arg4[%100, %c0_45, %c0_46] : memref<4x32x24xbf16, #tpu.memory_space<vmem>>, vector<1x32x24xbf16>
      %102 = vector.shape_cast %101 : vector<1x32x24xbf16> to vector<32x24xbf16>
      %cst_47 = arith.constant dense<0.000000e+00> : vector<16x24xf32>
      %103 = tpu.matmul %28, %102, %cst_47 {dimension_numbers = #tpu.dot_dimension_numbers<[1], [0], [0], [1], [0, 0, 1, 1], [], []>} : vector<16x32xbf16>, vector<32x24xbf16>, vector<16x24xf32> -> vector<16x24xf32>
      %104 = arith.index_cast %arg15 : i32 to index
      %c0_48 = arith.constant 0 : index
      %c0_49 = arith.constant 0 : index
      %105 = vector.load %arg5[%104, %c0_48, %c0_49] : memref<4x1x24xf32, #tpu.memory_space<vmem>>, vector<1x1x24xf32>
      %106 = vector.shape_cast %105 : vector<1x1x24xf32> to vector<1x24xf32>
      %107 = vector.broadcast %106 : vector<1x24xf32> to vector<16x24xf32>
      %108 = arith.addf %103, %107 : vector<16x24xf32>
      %109 = vector.extract_strided_slice %108 {offsets = [0, 0], sizes = [16, 8], strides = [1, 1]} : vector<16x24xf32> to vector<16x8xf32>
      %110 = arith.truncf %109 : vector<16x8xf32> to vector<16x8xbf16>
      %111 = vector.extract_strided_slice %108 {offsets = [0, 8], sizes = [16, 8], strides = [1, 1]} : vector<16x24xf32> to vector<16x8xf32>
      %112 = arith.truncf %111 : vector<16x8xf32> to vector<16x8xbf16>
      %113 = vector.extract_strided_slice %108 {offsets = [0, 16], sizes = [16, 8], strides = [1, 1]} : vector<16x24xf32> to vector<16x8xf32>
      %114 = arith.truncf %113 : vector<16x8xf32> to vector<16x8xbf16>
      %cst_50 = arith.constant dense<0.000000e+00> : vector<16x16xf32>
      %115 = tpu.matmul %110, %112, %cst_50 {dimension_numbers = #tpu.dot_dimension_numbers<[1], [1], [0], [0], [0, 0, 1, 0], [], []>} : vector<16x8xbf16>, vector<16x8xbf16>, vector<16x16xf32> -> vector<16x16xf32>
      %116 = vector.broadcast %34 : vector<1x16xf32> to vector<16x16xf32>
      %117 = arith.addf %115, %116 : vector<16x16xf32>
      %cst_51 = arith.constant dense<0xFF800000> : vector<16xf32>
      %118 = vector.multi_reduction <maximumf>, %117, %cst_51 [1] : vector<16x16xf32> to vector<16xf32>
      %119 = vector.shape_cast %118 : vector<16xf32> to vector<16x1xf32>
      %120 = vector.broadcast %119 : vector<16x1xf32> to vector<16x16xf32>
      %121 = arith.subf %117, %120 : vector<16x16xf32>
      %122 = math.exp %121 : vector<16x16xf32>
      %cst_52 = arith.constant dense<0.000000e+00> : vector<16xf32>
      %123 = vector.multi_reduction <add>, %122, %cst_52 [1] : vector<16x16xf32> to vector<16xf32>
      %124 = vector.shape_cast %123 : vector<16xf32> to vector<16x1xf32>
      %125 = tpu.reciprocal %124 {approx = true} : vector<16x1xf32> -> vector<16x1xf32>
      %126 = arith.truncf %122 : vector<16x16xf32> to vector<16x16xbf16>
      %cst_53 = arith.constant dense<0.000000e+00> : vector<16x8xf32>
      %127 = tpu.matmul %126, %114, %cst_53 {dimension_numbers = #tpu.dot_dimension_numbers<[1], [0], [0], [1], [0, 0, 1, 1], [], []>} : vector<16x16xbf16>, vector<16x8xbf16>, vector<16x8xf32> -> vector<16x8xf32>
      %128 = vector.broadcast %125 : vector<16x1xf32> to vector<16x8xf32>
      %129 = arith.mulf %127, %128 : vector<16x8xf32>
      %130 = arith.truncf %129 : vector<16x8xf32> to vector<16x8xbf16>
      %131 = arith.index_cast %arg15 : i32 to index
      %c0_54 = arith.constant 0 : index
      %c0_55 = arith.constant 0 : index
      %132 = vector.load %arg6[%131, %c0_54, %c0_55] : memref<4x8x32xbf16, #tpu.memory_space<vmem>>, vector<1x8x32xbf16>
      %133 = vector.shape_cast %132 : vector<1x8x32xbf16> to vector<8x32xbf16>
      %cst_56 = arith.constant dense<0.000000e+00> : vector<16x32xf32>
      %134 = tpu.matmul %130, %133, %cst_56 {dimension_numbers = #tpu.dot_dimension_numbers<[1], [0], [0], [1], [0, 0, 1, 1], [], []>} : vector<16x8xbf16>, vector<8x32xbf16>, vector<16x32xf32> -> vector<16x32xf32>
      %135 = arith.addf %arg16, %134 : vector<16x32xf32>
      scf.yield %135 : vector<16x32xf32>
    }
    %c4_i32_14 = arith.constant 4 : i32
    %38 = arith.addf %1, %37 : vector<16x32xf32>
    %c0_15 = arith.constant 0 : index
    %c0_16 = arith.constant 0 : index
    %39 = vector.load %arg7[%c0_15, %c0_16] : memref<1x32xf32, #tpu.memory_space<vmem>>, vector<1x32xf32>
    %40 = vector.broadcast %39 : vector<1x32xf32> to vector<16x32xf32>
    %41 = arith.addf %38, %40 : vector<16x32xf32>
    %c0_17 = arith.constant 0 : index
    %c0_18 = arith.constant 0 : index
    %42 = vector.load %arg8[%c0_17, %c0_18] : memref<1x32xf32, #tpu.memory_space<vmem>>, vector<1x32xf32>
    %c0_19 = arith.constant 0 : index
    %c0_20 = arith.constant 0 : index
    %43 = vector.load %arg9[%c0_19, %c0_20] : memref<1x32xf32, #tpu.memory_space<vmem>>, vector<1x32xf32>
    %cst_21 = arith.constant dense<0.000000e+00> : vector<16xf32>
    %44 = vector.multi_reduction <add>, %41, %cst_21 [1] : vector<16x32xf32> to vector<16xf32>
    %45 = vector.shape_cast %44 : vector<16xf32> to vector<16x1xf32>
    %cst_22 = arith.constant 3.200000e+01 : f32
    %46 = vector.broadcast %cst_22 : f32 to vector<16x1xf32>
    %47 = arith.divf %45, %46 : vector<16x1xf32>
    %48 = arith.mulf %41, %41 : vector<16x32xf32>
    %cst_23 = arith.constant dense<0.000000e+00> : vector<16xf32>
    %49 = vector.multi_reduction <add>, %48, %cst_23 [1] : vector<16x32xf32> to vector<16xf32>
    %50 = vector.shape_cast %49 : vector<16xf32> to vector<16x1xf32>
    %cst_24 = arith.constant 3.200000e+01 : f32
    %51 = vector.broadcast %cst_24 : f32 to vector<16x1xf32>
    %52 = arith.divf %50, %51 : vector<16x1xf32>
    %53 = arith.mulf %47, %47 : vector<16x1xf32>
    %54 = arith.subf %52, %53 : vector<16x1xf32>
    %cst_25 = arith.constant 0.000000e+00 : f32
    %55 = vector.broadcast %cst_25 : f32 to vector<16x1xf32>
    %56 = arith.maximumf %54, %55 : vector<16x1xf32>
    %57 = vector.broadcast %47 : vector<16x1xf32> to vector<16x32xf32>
    %58 = arith.subf %41, %57 : vector<16x32xf32>
    %cst_26 = arith.constant 9.99999974E-6 : f32
    %59 = vector.broadcast %cst_26 : f32 to vector<16x1xf32>
    %60 = arith.addf %56, %59 : vector<16x1xf32>
    %61 = math.rsqrt %60 : vector<16x1xf32>
    %62 = vector.broadcast %61 : vector<16x1xf32> to vector<16x32xf32>
    %63 = arith.mulf %58, %62 : vector<16x32xf32>
    %64 = vector.broadcast %42 : vector<1x32xf32> to vector<16x32xf32>
    %65 = arith.mulf %63, %64 : vector<16x32xf32>
    %66 = vector.broadcast %43 : vector<1x32xf32> to vector<16x32xf32>
    %67 = arith.addf %65, %66 : vector<16x32xf32>
    %68 = arith.truncf %67 : vector<16x32xf32> to vector<16x32xbf16>
    %cst_27 = arith.constant 0.000000e+00 : f32
    %69 = vector.broadcast %cst_27 : f32 to vector<16x32xf32>
    %c0_i32_28 = arith.constant 0 : i32
    %70 = arith.index_cast %c0_i32_28 : i32 to index
    %c0_29 = arith.constant 0 : index
    %c0_30 = arith.constant 0 : index
    %71 = vector.load %arg10[%70, %c0_29, %c0_30] : memref<1x32x128xbf16, #tpu.memory_space<vmem>>, vector<1x32x128xbf16>
    %72 = vector.shape_cast %71 : vector<1x32x128xbf16> to vector<32x128xbf16>
    %cst_31 = arith.constant dense<0.000000e+00> : vector<16x128xf32>
    %73 = tpu.matmul %68, %72, %cst_31 {dimension_numbers = #tpu.dot_dimension_numbers<[1], [0], [0], [1], [0, 0, 1, 1], [], []>} : vector<16x32xbf16>, vector<32x128xbf16>, vector<16x128xf32> -> vector<16x128xf32>
    %74 = arith.index_cast %c0_i32_28 : i32 to index
    %c0_32 = arith.constant 0 : index
    %c0_33 = arith.constant 0 : index
    %75 = vector.load %arg11[%74, %c0_32, %c0_33] : memref<1x1x128xf32, #tpu.memory_space<vmem>>, vector<1x1x128xf32>
    %76 = vector.shape_cast %75 : vector<1x1x128xf32> to vector<1x128xf32>
    %77 = vector.broadcast %76 : vector<1x128xf32> to vector<16x128xf32>
    %78 = arith.addf %73, %77 : vector<16x128xf32>
    %cst_34 = arith.constant 1.702000e+00 : f32
    %79 = vector.broadcast %cst_34 : f32 to vector<16x128xf32>
    %80 = arith.mulf %79, %78 : vector<16x128xf32>
    %81 = arith.negf %80 : vector<16x128xf32>
    %82 = math.exp %81 : vector<16x128xf32>
    %cst_35 = arith.constant 1.000000e+00 : f32
    %83 = vector.broadcast %cst_35 : f32 to vector<16x128xf32>
    %84 = arith.addf %83, %82 : vector<16x128xf32>
    %85 = arith.divf %83, %84 : vector<16x128xf32>
    %86 = arith.mulf %78, %85 : vector<16x128xf32>
    %87 = arith.truncf %86 : vector<16x128xf32> to vector<16x128xbf16>
    %88 = arith.index_cast %c0_i32_28 : i32 to index
    %c0_36 = arith.constant 0 : index
    %c0_37 = arith.constant 0 : index
    %89 = vector.load %arg12[%88, %c0_36, %c0_37] : memref<1x128x32xbf16, #tpu.memory_space<vmem>>, vector<1x128x32xbf16>
    %90 = vector.shape_cast %89 : vector<1x128x32xbf16> to vector<128x32xbf16>
    %cst_38 = arith.constant dense<0.000000e+00> : vector<16x32xf32>
    %91 = tpu.matmul %87, %90, %cst_38 {dimension_numbers = #tpu.dot_dimension_numbers<[1], [0], [0], [1], [0, 0, 1, 1], [], []>} : vector<16x128xbf16>, vector<128x32xbf16>, vector<16x32xf32> -> vector<16x32xf32>
    %92 = arith.addf %69, %91 : vector<16x32xf32>
    %c1_i32_39 = arith.constant 1 : i32
    %93 = arith.addf %41, %92 : vector<16x32xf32>
    %c0_40 = arith.constant 0 : index
    %c0_41 = arith.constant 0 : index
    %94 = vector.load %arg13[%c0_40, %c0_41] : memref<1x32xf32, #tpu.memory_space<vmem>>, vector<1x32xf32>
    %95 = vector.broadcast %94 : vector<1x32xf32> to vector<16x32xf32>
    %96 = arith.addf %93, %95 : vector<16x32xf32>
    %c0_42 = arith.constant 0 : index
    %c0_43 = arith.constant 0 : index
    %c0_44 = arith.constant 0 : index
    %97 = vector.load %arg14[%c0_42, %c0_43, %c0_44] : memref<1x16x32xf32, #tpu.memory_space<vmem>>, vector<1x16x32xf32>
    %98 = vector.shape_cast %97 : vector<1x16x32xf32> to vector<16x32xf32>
    %99 = vector.shape_cast %96 : vector<16x32xf32> to vector<1x16x32xf32>
    tpu.vector_store %arg14[%c0_42, %c0_43, %c0_44], %99 {strides = array<i32>} : memref<1x16x32xf32, #tpu.memory_space<vmem>>, vector<1x16x32xf32>,
    return
  }
  func.func @transform_0(%arg0: i32) -> (i32, i32, i32) {
    %c0_i32 = arith.constant 0 : i32
    %c0_i32_0 = arith.constant 0 : i32
    %c0_i32_1 = arith.constant 0 : i32
    return %arg0, %c0_i32, %c0_i32_0 : i32, i32, i32
  }
  func.func @transform_1(%arg0: i32) -> (i32, i32) {
    %c0_i32 = arith.constant 0 : i32
    %c0_i32_0 = arith.constant 0 : i32
    %c0_i32_1 = arith.constant 0 : i32
    return %c0_i32, %c0_i32_0 : i32, i32
  }
  func.func @transform_2(%arg0: i32) -> (i32, i32) {
    %c0_i32 = arith.constant 0 : i32
    %c0_i32_0 = arith.constant 0 : i32
    %c0_i32_1 = arith.constant 0 : i32
    return %c0_i32, %c0_i32_0 : i32, i32
  }
  func.func @transform_3(%arg0: i32) -> (i32, i32, i32) {
    %c0_i32 = arith.constant 0 : i32
    %c0_i32_0 = arith.constant 0 : i32
    %c0_i32_1 = arith.constant 0 : i32
    %c0_i32_2 = arith.constant 0 : i32
    return %c0_i32, %c0_i32_0, %c0_i32_1 : i32, i32, i32
  }
  func.func @transform_4(%arg0: i32) -> (i32, i32, i32) {
    %c0_i32 = arith.constant 0 : i32
    %c0_i32_0 = arith.constant 0 : i32
    %c0_i32_1 = arith.constant 0 : i32
    %c0_i32_2 = arith.constant 0 : i32
    return %c0_i32, %c0_i32_0, %c0_i32_1 : i32, i32, i32
  }
  func.func @transform_5(%arg0: i32) -> (i32, i32, i32) {
    %c0_i32 = arith.constant 0 : i32
    %c0_i32_0 = arith.constant 0 : i32
    %c0_i32_1 = arith.constant 0 : i32
    %c0_i32_2 = arith.constant 0 : i32
    return %c0_i32, %c0_i32_0, %c0_i32_1 : i32, i32, i32
  }
  func.func @transform_6(%arg0: i32) -> (i32, i32) {
    %c0_i32 = arith.constant 0 : i32
    %c0_i32_0 = arith.constant 0 : i32
    %c0_i32_1 = arith.constant 0 : i32
    return %c0_i32, %c0_i32_0 : i32, i32
  }
  func.func @transform_7(%arg0: i32) -> (i32, i32) {
    %c0_i32 = arith.constant 0 : i32
    %c0_i32_0 = arith.constant 0 : i32
    %c0_i32_1 = arith.constant 0 : i32
    return %c0_i32, %c0_i32_0 : i32, i32
  }
  func.func @transform_8(%arg0: i32) -> (i32, i32) {
    %c0_i32 = arith.constant 0 : i32
    %c0_i32_0 = arith.constant 0 : i32
    %c0_i32_1 = arith.constant 0 : i32
    return %c0_i32, %c0_i32_0 : i32, i32
  }
  func.func @transform_9(%arg0: i32) -> (i32, i32, i32) {
    %c0_i32 = arith.constant 0 : i32
    %c0_i32_0 = arith.constant 0 : i32
    %c0_i32_1 = arith.constant 0 : i32
    %c0_i32_2 = arith.constant 0 : i32
    return %c0_i32, %c0_i32_0, %c0_i32_1 : i32, i32, i32
  }
  func.func @transform_10(%arg0: i32) -> (i32, i32, i32) {
    %c0_i32 = arith.constant 0 : i32
    %c0_i32_0 = arith.constant 0 : i32
    %c0_i32_1 = arith.constant 0 : i32
    %c0_i32_2 = arith.constant 0 : i32
    return %c0_i32, %c0_i32_0, %c0_i32_1 : i32, i32, i32
  }
  func.func @transform_11(%arg0: i32) -> (i32, i32, i32) {
    %c0_i32 = arith.constant 0 : i32
    %c0_i32_0 = arith.constant 0 : i32
    %c0_i32_1 = arith.constant 0 : i32
    %c0_i32_2 = arith.constant 0 : i32
    return %c0_i32, %c0_i32_0, %c0_i32_1 : i32, i32, i32
  }
  func.func @transform_12(%arg0: i32) -> (i32, i32) {
    %c0_i32 = arith.constant 0 : i32
    %c0_i32_0 = arith.constant 0 : i32
    %c0_i32_1 = arith.constant 0 : i32
    return %c0_i32, %c0_i32_0 : i32, i32
  }
  func.func @transform_13(%arg0: i32) -> (i32, i32, i32) {
    %c0_i32 = arith.constant 0 : i32
    %c0_i32_0 = arith.constant 0 : i32
    %c0_i32_1 = arith.constant 0 : i32
    return %arg0, %c0_i32, %c0_i32_0 : i32, i32, i32
  }
}

</mosaic_0001>

<llo_original>
// kernel: tpu_custom_call.1
$region0: #{tpu_custom_call.1}
  #allocation0 [shape = 'u32[]', space=smem, size = 0x4, offset = 0x4, fixed_abs, tag = 'smem constant byte address 0x4 - core index']
  #allocation1 [shape = 'u32[144,128]{1,0:T(1,128)}', space=vmem, size = 0x12000, scoped, tag = 'internal scratch']
  %s0 = inlined_call_operand.vmem [shape: f32[2,16,32], index: 0, kind: input, shape index: {}]
  %s1 = inlined_call_operand.vmem [shape: f32[1,32], index: 1, kind: input, shape index: {}]
  %s2 = inlined_call_operand.vmem [shape: f32[1,32], index: 2, kind: input, shape index: {}]
  %s3 = inlined_call_operand.vmem [shape: bf16[4,32,24], index: 3, kind: input, shape index: {}]
  %s4 = inlined_call_operand.vmem [shape: f32[4,1,24], index: 4, kind: input, shape index: {}]
  %s5 = inlined_call_operand.vmem [shape: bf16[4,8,32], index: 5, kind: input, shape index: {}]
  %s6 = inlined_call_operand.vmem [shape: f32[1,32], index: 6, kind: input, shape index: {}]
  %s7 = inlined_call_operand.vmem [shape: f32[1,32], index: 7, kind: input, shape index: {}]
  %s8 = inlined_call_operand.vmem [shape: f32[1,32], index: 8, kind: input, shape index: {}]
  %s9 = inlined_call_operand.vmem [shape: bf16[1,32,128], index: 9, kind: input, shape index: {}]
  %s10 = inlined_call_operand.vmem [shape: f32[1,1,128], index: 10, kind: input, shape index: {}]
  %s11 = inlined_call_operand.vmem [shape: bf16[1,128,32], index: 11, kind: input, shape index: {}]
  %s12 = inlined_call_operand.vmem [shape: f32[1,32], index: 12, kind: input, shape index: {}]
  %s13 = inlined_call_operand.hbm [shape: f32[2,16,32], index: 13, kind: output, shape index: {}]
  %s14 = sld [smem:[#allocation0]]
  $region92: #{tpu_custom_call.1} parent=0
    _
  %s16 = ssub.s32 1, %s14
  %s17 = scalar_select 0, %s16, %s14
  $region1: #{tpu_custom_call.1} parent=0
    #allocation2 [shape = 'u8[16384]{0}', space=vmem, size = 0x4000, scoped, tag = 'output window, operand 0']
    #allocation3 [shape = 's32[2]{0}', space=sflag, size = 0x8, scoped, tag = 'scoped memory for tpu_custom_call.1']
    %18 = vsyncpa [#allocation3], 0
    %s19 = scalar_lea.sflag [#allocation3], 1
    %20 = vsyncpa %s19, 0
    loop: start=0, step=1, limit=4
    $region2: #{tpu_custom_call.1} parent=1 // loop_pre_header
      _
    $region3: #{tpu_custom_call.1} parent=1 // loop_header
      %s22 = sphi 0, %s26
      %p23 = scmp.ge.s32.totalorder %s22, 4
      %s32 = sphi 0, %s34
      %s35 = sphi 0, %s32
      %s36 = sphi 0, %s35
      %s52 = sphi 0, %s36
      %s56 = sphi 0, %s56
      %s58 = sphi 0, %s56
      %s59 = sphi 0, %s58
      %s73 = sphi 0, %s59
      %s77 = sphi 0, %s77
      %s79 = sphi 0, %s77
      %s80 = sphi 0, %s79
      %s94 = sphi 0, %s80
      %s98 = sphi 0, %s98
      %s100 = sphi 0, %s98
      %s101 = sphi 0, %s100
      %s115 = sphi 0, %s101
      %s119 = sphi 0, %s119
      %s121 = sphi 0, %s119
      %s122 = sphi 0, %s121
      %s136 = sphi 0, %s122
      %s140 = sphi 0, %s140
      %s142 = sphi 0, %s140
      %s143 = sphi 0, %s142
      %s157 = sphi 0, %s143
      %s161 = sphi 0, %s161
      %s163 = sphi 0, %s161
      %s164 = sphi 0, %s163
      %s178 = sphi 0, %s164
      %s182 = sphi 0, %s182
      %s184 = sphi 0, %s182
      %s185 = sphi 0, %s184
      %s199 = sphi 0, %s185
      %s203 = sphi 0, %s203
      %s205 = sphi 0, %s203
      %s206 = sphi 0, %s205
      %s220 = sphi 0, %s206
      %s224 = sphi 0, %s224
      %s226 = sphi 0, %s224
      %s227 = sphi 0, %s226
      %s241 = sphi 0, %s227
      %s245 = sphi 0, %s245
      %s247 = sphi 0, %s245
      %s248 = sphi 0, %s247
      %s262 = sphi 0, %s248
      %s266 = sphi 0, %s266
      %s268 = sphi 0, %s266
      %s269 = sphi 0, %s268
      %s283 = sphi 0, %s269
      %s287 = sphi 0, %s287
      %s289 = sphi 0, %s287
      %s290 = sphi 0, %s289
      %s304 = sphi 0, %s290
      %s310 = sphi 0, %s312
      %s313 = sphi 0, %s310
      %s314 = sphi 0, %s313
      %s330 = sphi 0, %s314
    $region4: #{tpu_custom_call.1} parent=1 // loop_header_branch
      %25 = sbr.rel (%p23) target = $region8
    $region5: #{tpu_custom_call.1} parent=1 // loop_body
      %s27 = ssub.s32 %s22, 1
      %s28 = ssub.s32 %s22, 2
      %s29 = sadd.s32 %s22, 1
      %s30 = ssub.s32 %s22, %s29
      %p31 = scmp.eq.s32.totalorder %s30, 0
      %s33 = sadd.s32 %s32, 1
      %s34 = scalar_select %p31, %s32, %s33
      %p37 = pneg %p31
      %p38 = scmp.eq.s32.totalorder %s22, 1
      %p39 = por %p37, %p38
      %p40 = scmp.ne.s32.totalorder %s32, %s35
      %p41 = scmp.eq.s32.totalorder %s22, 0
      %p42 = por %p40, %p41
      %p43 = scmp.ne.s32.totalorder %s32, %s35
      %p44 = scmp.eq.s32.totalorder %s27, 1
      %p45 = por %p43, %p44
      %p46 = scmp.ne.s32.totalorder %s35, %s36
      %p47 = scmp.eq.s32.totalorder %s27, 0
      %p48 = por %p46, %p47
      %p49 = scmp.ne.s32.totalorder %s35, %s36
      %p50 = scmp.eq.s32.totalorder %s28, 1
      %p51 = por %p49, %p50
      %p53 = scmp.ne.s32.totalorder %s36, %s52
      %p54 = scmp.eq.s32.totalorder %s28, 0
      %p55 = por %p53, %p54
      %s57 = sadd.s32 %s56, 1
      %p60 = scmp.eq.s32.totalorder %s22, 1
      %p61 = scmp.ne.s32.totalorder %s56, %s58
      %p62 = scmp.eq.s32.totalorder %s22, 0
      %p63 = por %p61, %p62
      %p64 = scmp.ne.s32.totalorder %s56, %s58
      %p65 = scmp.eq.s32.totalorder %s27, 1
      %p66 = por %p64, %p65
      %p67 = scmp.ne.s32.totalorder %s58, %s59
      %p68 = scmp.eq.s32.totalorder %s27, 0
      %p69 = por %p67, %p68
      %p70 = scmp.ne.s32.totalorder %s58, %s59
      %p71 = scmp.eq.s32.totalorder %s28, 1
      %p72 = por %p70, %p71
      %p74 = scmp.ne.s32.totalorder %s59, %s73
      %p75 = scmp.eq.s32.totalorder %s28, 0
      %p76 = por %p74, %p75
      %s78 = sadd.s32 %s77, 1
      %p81 = scmp.eq.s32.totalorder %s22, 1
      %p82 = scmp.ne.s32.totalorder %s77, %s79
      %p83 = scmp.eq.s32.totalorder %s22, 0
      %p84 = por %p82, %p83
      %p85 = scmp.ne.s32.totalorder %s77, %s79
      %p86 = scmp.eq.s32.totalorder %s27, 1
      %p87 = por %p85, %p86
      %p88 = scmp.ne.s32.totalorder %s79, %s80
      %p89 = scmp.eq.s32.totalorder %s27, 0
      %p90 = por %p88, %p89
      %p91 = scmp.ne.s32.totalorder %s79, %s80
      %p92 = scmp.eq.s32.totalorder %s28, 1
      %p93 = por %p91, %p92
      %p95 = scmp.ne.s32.totalorder %s80, %s94
      %p96 = scmp.eq.s32.totalorder %s28, 0
      %p97 = por %p95, %p96
      %s99 = sadd.s32 %s98, 1
      %p102 = scmp.eq.s32.totalorder %s22, 1
      %p103 = scmp.ne.s32.totalorder %s98, %s100
      %p104 = scmp.eq.s32.totalorder %s22, 0
      %p105 = por %p103, %p104
      %p106 = scmp.ne.s32.totalorder %s98, %s100
      %p107 = scmp.eq.s32.totalorder %s27, 1
      %p108 = por %p106, %p107
      %p109 = scmp.ne.s32.totalorder %s100, %s101
      %p110 = scmp.eq.s32.totalorder %s27, 0
      %p111 = por %p109, %p110
      %p112 = scmp.ne.s32.totalorder %s100, %s101
      %p113 = scmp.eq.s32.totalorder %s28, 1
      %p114 = por %p112, %p113
      %p116 = scmp.ne.s32.totalorder %s101, %s115
      %p117 = scmp.eq.s32.totalorder %s28, 0
      %p118 = por %p116, %p117
      %s120 = sadd.s32 %s119, 1
      %p123 = scmp.eq.s32.totalorder %s22, 1
      %p124 = scmp.ne.s32.totalorder %s119, %s121
      %p125 = scmp.eq.s32.totalorder %s22, 0
      %p126 = por %p124, %p125
      %p127 = scmp.ne.s32.totalorder %s119, %s121
      %p128 = scmp.eq.s32.totalorder %s27, 1
      %p129 = por %p127, %p128
      %p130 = scmp.ne.s32.totalorder %s121, %s122
      %p131 = scmp.eq.s32.totalorder %s27, 0
      %p132 = por %p130, %p131
      %p133 = scmp.ne.s32.totalorder %s121, %s122
      %p134 = scmp.eq.s32.totalorder %s28, 1
      %p135 = por %p133, %p134
      %p137 = scmp.ne.s32.totalorder %s122, %s136
      %p138 = scmp.eq.s32.totalorder %s28, 0
      %p139 = por %p137, %p138
      %s141 = sadd.s32 %s140, 1
      %p144 = scmp.eq.s32.totalorder %s22, 1
      %p145 = scmp.ne.s32.totalorder %s140, %s142
      %p146 = scmp.eq.s32.totalorder %s22, 0
      %p147 = por %p145, %p146
      %p148 = scmp.ne.s32.totalorder %s140, %s142
      %p149 = scmp.eq.s32.totalorder %s27, 1
      %p150 = por %p148, %p149
      %p151 = scmp.ne.s32.totalorder %s142, %s143
      %p152 = scmp.eq.s32.totalorder %s27, 0
      %p153 = por %p151, %p152
      %p154 = scmp.ne.s32.totalorder %s142, %s143
      %p155 = scmp.eq.s32.totalorder %s28, 1
      %p156 = por %p154, %p155
      %p158 = scmp.ne.s32.totalorder %s143, %s157
      %p159 = scmp.eq.s32.totalorder %s28, 0
      %p160 = por %p158, %p159
      %s162 = sadd.s32 %s161, 1
      %p165 = scmp.eq.s32.totalorder %s22, 1
      %p166 = scmp.ne.s32.totalorder %s161, %s163
      %p167 = scmp.eq.s32.totalorder %s22, 0
      %p168 = por %p166, %p167
      %p169 = scmp.ne.s32.totalorder %s161, %s163
      %p170 = scmp.eq.s32.totalorder %s27, 1
      %p171 = por %p169, %p170
      %p172 = scmp.ne.s32.totalorder %s163, %s164
      %p173 = scmp.eq.s32.totalorder %s27, 0
      %p174 = por %p172, %p173
      %p175 = scmp.ne.s32.totalorder %s163, %s164
      %p176 = scmp.eq.s32.totalorder %s28, 1
      %p177 = por %p175, %p176
      %p179 = scmp.ne.s32.totalorder %s164, %s178
      %p180 = scmp.eq.s32.totalorder %s28, 0
      %p181 = por %p179, %p180
      %s183 = sadd.s32 %s182, 1
      %p186 = scmp.eq.s32.totalorder %s22, 1
      %p187 = scmp.ne.s32.totalorder %s182, %s184
      %p188 = scmp.eq.s32.totalorder %s22, 0
      %p189 = por %p187, %p188
      %p190 = scmp.ne.s32.totalorder %s182, %s184
      %p191 = scmp.eq.s32.totalorder %s27, 1
      %p192 = por %p190, %p191
      %p193 = scmp.ne.s32.totalorder %s184, %s185
      %p194 = scmp.eq.s32.totalorder %s27, 0
      %p195 = por %p193, %p194
      %p196 = scmp.ne.s32.totalorder %s184, %s185
      %p197 = scmp.eq.s32.totalorder %s28, 1
      %p198 = por %p196, %p197
      %p200 = scmp.ne.s32.totalorder %s185, %s199
      %p201 = scmp.eq.s32.totalorder %s28, 0
      %p202 = por %p200, %p201
      %s204 = sadd.s32 %s203, 1
      %p207 = scmp.eq.s32.totalorder %s22, 1
      %p208 = scmp.ne.s32.totalorder %s203, %s205
      %p209 = scmp.eq.s32.totalorder %s22, 0
      %p210 = por %p208, %p209
      %p211 = scmp.ne.s32.totalorder %s203, %s205
      %p212 = scmp.eq.s32.totalorder %s27, 1
      %p213 = por %p211, %p212
      %p214 = scmp.ne.s32.totalorder %s205, %s206
      %p215 = scmp.eq.s32.totalorder %s27, 0
      %p216 = por %p214, %p215
      %p217 = scmp.ne.s32.totalorder %s205, %s206
      %p218 = scmp.eq.s32.totalorder %s28, 1
      %p219 = por %p217, %p218
      %p221 = scmp.ne.s32.totalorder %s206, %s220
      %p222 = scmp.eq.s32.totalorder %s28, 0
      %p223 = por %p221, %p222
      %s225 = sadd.s32 %s224, 1
      %p228 = scmp.eq.s32.totalorder %s22, 1
      %p229 = scmp.ne.s32.totalorder %s224, %s226
      %p230 = scmp.eq.s32.totalorder %s22, 0
      %p231 = por %p229, %p230
      %p232 = scmp.ne.s32.totalorder %s224, %s226
      %p233 = scmp.eq.s32.totalorder %s27, 1
      %p234 = por %p232, %p233
      %p235 = scmp.ne.s32.totalorder %s226, %s227
      %p236 = scmp.eq.s32.totalorder %s27, 0
      %p237 = por %p235, %p236
      %p238 = scmp.ne.s32.totalorder %s226, %s227
      %p239 = scmp.eq.s32.totalorder %s28, 1
      %p240 = por %p238, %p239
      %p242 = scmp.ne.s32.totalorder %s227, %s241
      %p243 = scmp.eq.s32.totalorder %s28, 0
      %p244 = por %p242, %p243
      %s246 = sadd.s32 %s245, 1
      %p249 = scmp.eq.s32.totalorder %s22, 1
      %p250 = scmp.ne.s32.totalorder %s245, %s247
      %p251 = scmp.eq.s32.totalorder %s22, 0
      %p252 = por %p250, %p251
      %p253 = scmp.ne.s32.totalorder %s245, %s247
      %p254 = scmp.eq.s32.totalorder %s27, 1
      %p255 = por %p253, %p254
      %p256 = scmp.ne.s32.totalorder %s247, %s248
      %p257 = scmp.eq.s32.totalorder %s27, 0
      %p258 = por %p256, %p257
      %p259 = scmp.ne.s32.totalorder %s247, %s248
      %p260 = scmp.eq.s32.totalorder %s28, 1
      %p261 = por %p259, %p260
      %p263 = scmp.ne.s32.totalorder %s248, %s262
      %p264 = scmp.eq.s32.totalorder %s28, 0
      %p265 = por %p263, %p264
      %s267 = sadd.s32 %s266, 1
      %p270 = scmp.eq.s32.totalorder %s22, 1
      %p271 = scmp.ne.s32.totalorder %s266, %s268
      %p272 = scmp.eq.s32.totalorder %s22, 0
      %p273 = por %p271, %p272
      %p274 = scmp.ne.s32.totalorder %s266, %s268
      %p275 = scmp.eq.s32.totalorder %s27, 1
      %p276 = por %p274, %p275
      %p277 = scmp.ne.s32.totalorder %s268, %s269
      %p278 = scmp.eq.s32.totalorder %s27, 0
      %p279 = por %p277, %p278
      %p280 = scmp.ne.s32.totalorder %s268, %s269
      %p281 = scmp.eq.s32.totalorder %s28, 1
      %p282 = por %p280, %p281
      %p284 = scmp.ne.s32.totalorder %s269, %s283
      %p285 = scmp.eq.s32.totalorder %s28, 0
      %p286 = por %p284, %p285
      %s288 = sadd.s32 %s287, 1
      %p291 = scmp.eq.s32.totalorder %s22, 1
      %p292 = scmp.ne.s32.totalorder %s287, %s289
      %p293 = scmp.eq.s32.totalorder %s22, 0
      %p294 = por %p292, %p293
      %p295 = scmp.ne.s32.totalorder %s287, %s289
      %p296 = scmp.eq.s32.totalorder %s27, 1
      %p297 = por %p295, %p296
      %p298 = scmp.ne.s32.totalorder %s289, %s290
      %p299 = scmp.eq.s32.totalorder %s27, 0
      %p300 = por %p298, %p299
      %p301 = scmp.ne.s32.totalorder %s289, %s290
      %p302 = scmp.eq.s32.totalorder %s28, 1
      %p303 = por %p301, %p302
      %p305 = scmp.ne.s32.totalorder %s290, %s304
      %p306 = scmp.eq.s32.totalorder %s28, 0
      %p307 = por %p305, %p306
      %s308 = ssub.s32 %s22, %s29
      %p309 = scmp.eq.s32.totalorder %s308, 0
      %s311 = sadd.s32 %s310, 1
      %s312 = scalar_select %p309, %s310, %s311
      %p315 = pneg %p309
      %p316 = scmp.eq.s32.totalorder %s22, 1
      %p317 = por %p315, %p316
      %p318 = scmp.ne.s32.totalorder %s310, %s313
      %p319 = scmp.eq.s32.totalorder %s22, 0
      %p320 = por %p318, %p319
      %p321 = scmp.ne.s32.totalorder %s310, %s313
      %p322 = scmp.eq.s32.totalorder %s27, 1
      %p323 = por %p321, %p322
      %p324 = scmp.ne.s32.totalorder %s313, %s314
      %p325 = scmp.eq.s32.totalorder %s27, 0
      %p326 = por %p324, %p325
      %p327 = scmp.ne.s32.totalorder %s313, %s314
      %p328 = scmp.eq.s32.totalorder %s28, 1
      %p329 = por %p327, %p328
      %p331 = scmp.ne.s32.totalorder %s314, %s330
      %p332 = scmp.eq.s32.totalorder %s28, 0
      %p333 = por %p331, %p332
      %p334 = scmp.le.s32.totalorder 1, %s22
      %p335 = scmp.lt.s32.totalorder %s22, 3
      %p336 = pnand %p334, %p335
      %p337 = pneg %p336
      // Predicated region
      $region9: #{tpu_custom_call.1} parent=5 // pred_check
        _
      $region10: #{tpu_custom_call.1} parent=5 // pred_check_branch
        %339 = sbr.rel (%p336) target = $region12
      $region11: #{tpu_custom_call.1} parent=5 // pred_region
        %s340 = ssub.s32 %s22, 1
        // Predicated region
        $region13: #{tpu_custom_call.1} parent=11 // pred_check
          %p341 = pneg %p69
        $region14: #{tpu_custom_call.1} parent=11 // pred_check_branch
          %343 = sbr.rel (%p341) target = $region16
        $region15: #{tpu_custom_call.1} parent=11 // pred_region
          _
        $region16: #{tpu_custom_call.1} parent=11 // pred_fallthru
          _
        // Predicated region
        $region17: #{tpu_custom_call.1} parent=11 // pred_check
          %p344 = pneg %p90
        $region18: #{tpu_custom_call.1} parent=11 // pred_check_branch
          %346 = sbr.rel (%p344) target = $region20
        $region19: #{tpu_custom_call.1} parent=11 // pred_region
          _
        $region20: #{tpu_custom_call.1} parent=11 // pred_fallthru
          _
        // Predicated region
        $region21: #{tpu_custom_call.1} parent=11 // pred_check
          %p347 = pneg %p111
        $region22: #{tpu_custom_call.1} parent=11 // pred_check_branch
          %349 = sbr.rel (%p347) target = $region24
        $region23: #{tpu_custom_call.1} parent=11 // pred_region
          _
        $region24: #{tpu_custom_call.1} parent=11 // pred_fallthru
          _
        // Predicated region
        $region25: #{tpu_custom_call.1} parent=11 // pred_check
          %p350 = pneg %p132
        $region26: #{tpu_custom_call.1} parent=11 // pred_check_branch
          %352 = sbr.rel (%p350) target = $region28
        $region27: #{tpu_custom_call.1} parent=11 // pred_region
          _
        $region28: #{tpu_custom_call.1} parent=11 // pred_fallthru
          _
        // Predicated region
        $region29: #{tpu_custom_call.1} parent=11 // pred_check
          %p353 = pneg %p153
        $region30: #{tpu_custom_call.1} parent=11 // pred_check_branch
          %355 = sbr.rel (%p353) target = $region32
        $region31: #{tpu_custom_call.1} parent=11 // pred_region
          _
        $region32: #{tpu_custom_call.1} parent=11 // pred_fallthru
          _
        // Predicated region
        $region33: #{tpu_custom_call.1} parent=11 // pred_check
          %p356 = pneg %p174
        $region34: #{tpu_custom_call.1} parent=11 // pred_check_branch
          %358 = sbr.rel (%p356) target = $region36
        $region35: #{tpu_custom_call.1} parent=11 // pred_region
          _
        $region36: #{tpu_custom_call.1} parent=11 // pred_fallthru
          _
        // Predicated region
        $region37: #{tpu_custom_call.1} parent=11 // pred_check
          %p359 = pneg %p195
        $region38: #{tpu_custom_call.1} parent=11 // pred_check_branch
          %361 = sbr.rel (%p359) target = $region40
        $region39: #{tpu_custom_call.1} parent=11 // pred_region
          _
        $region40: #{tpu_custom_call.1} parent=11 // pred_fallthru
          _
        // Predicated region
        $region41: #{tpu_custom_call.1} parent=11 // pred_check
          %p362 = pneg %p216
        $region42: #{tpu_custom_call.1} parent=11 // pred_check_branch
          %364 = sbr.rel (%p362) target = $region44
        $region43: #{tpu_custom_call.1} parent=11 // pred_region
          _
        $region44: #{tpu_custom_call.1} parent=11 // pred_fallthru
          _
        // Predicated region
        $region45: #{tpu_custom_call.1} parent=11 // pred_check
          %p365 = pneg %p237
        $region46: #{tpu_custom_call.1} parent=11 // pred_check_branch
          %367 = sbr.rel (%p365) target = $region48
        $region47: #{tpu_custom_call.1} parent=11 // pred_region
          _
        $region48: #{tpu_custom_call.1} parent=11 // pred_fallthru
          _
        // Predicated region
        $region49: #{tpu_custom_call.1} parent=11 // pred_check
          %p368 = pneg %p258
        $region50: #{tpu_custom_call.1} parent=11 // pred_check_branch
          %370 = sbr.rel (%p368) target = $region52
        $region51: #{tpu_custom_call.1} parent=11 // pred_region
          _
        $region52: #{tpu_custom_call.1} parent=11 // pred_fallthru
          _
        // Predicated region
        $region53: #{tpu_custom_call.1} parent=11 // pred_check
          %p371 = pneg %p279
        $region54: #{tpu_custom_call.1} parent=11 // pred_check_branch
          %373 = sbr.rel (%p371) target = $region56
        $region55: #{tpu_custom_call.1} parent=11 // pred_region
          _
        $region56: #{tpu_custom_call.1} parent=11 // pred_fallthru
          _
        // Predicated region
        $region57: #{tpu_custom_call.1} parent=11 // pred_check
          %p374 = pneg %p300
        $region58: #{tpu_custom_call.1} parent=11 // pred_check_branch
          %376 = sbr.rel (%p374) target = $region60
        $region59: #{tpu_custom_call.1} parent=11 // pred_region
          _
        $region60: #{tpu_custom_call.1} parent=11 // pred_fallthru
          _
      $region12: #{tpu_custom_call.1} parent=5 // pred_fallthru
        _
      %p377 = scmp.lt.s32.totalorder %s22, 2
      // Predicated region
      $region61: #{tpu_custom_call.1} parent=5 // pred_check
        %p378 = pneg %p377
      $region62: #{tpu_custom_call.1} parent=5 // pred_check_branch
        %380 = sbr.rel (%p378) target = $region64
      $region63: #{tpu_custom_call.1} parent=5 // pred_region
        // Predicated region
        $region65: #{tpu_custom_call.1} parent=63 // pred_check
          %p381 = pneg %p42
        $region66: #{tpu_custom_call.1} parent=63 // pred_check_branch
          %383 = sbr.rel (%p381) target = $region68
        $region67: #{tpu_custom_call.1} parent=63 // pred_region
          %p384 = scmp.lt.s32.totalorder %s22, 1
          %s385 = scalar_select %p384, %s22, 1
          %s386 = smul.addr %s385, 2
          %s387 = smul.addr %s386, 8
          %s388 = scalar_lea.vmem %s0, %s387
        $region68: #{tpu_custom_call.1} parent=63 // pred_fallthru
          _
      $region64: #{tpu_custom_call.1} parent=5 // pred_fallthru
        _
      %p389 = scmp.le.s32.totalorder 1, %s22
      %p390 = scmp.lt.s32.totalorder %s22, 3
      %p391 = pnand %p389, %p390
      %p392 = pneg %p391
      // Predicated region
      $region69: #{tpu_custom_call.1} parent=5 // pred_check
        _
      $region70: #{tpu_custom_call.1} parent=5 // pred_check_branch
        %394 = sbr.rel (%p391) target = $region72
      $region71: #{tpu_custom_call.1} parent=5 // pred_region
        %s395 = ssub.s32 %s22, 1
        %p396 = scmp.lt.s32.totalorder %s27, 1
        %s397 = scalar_select %p396, %s27, 1
        %s398 = smul.addr %s397, 2
        %s399 = smul.addr %s398, 8
        %s400 = scalar_lea.vmem %s0, %s399
        %p401 = pneg %p48
        %p402 = pneg %p45
        %p403 = pneg %p69
        %p404 = pneg %p66
        %p405 = pneg %p90
        %p406 = pneg %p87
        %p407 = pneg %p111
        %p408 = pneg %p108
        %p409 = pneg %p132
        %p410 = pneg %p129
        %p411 = pneg %p153
        %p412 = pneg %p150
        %p413 = pneg %p174
        %p414 = pneg %p171
        %p415 = pneg %p195
        %p416 = pneg %p192
        %p417 = pneg %p216
        %p418 = pneg %p213
        %p419 = pneg %p237
        %p420 = pneg %p234
        %p421 = pneg %p258
        %p422 = pneg %p255
        %p423 = pneg %p279
        %p424 = pneg %p276
        %p425 = pneg %p300
        %p426 = pneg %p297
        %p427 = pneg %p326
        %p428 = pneg %p323
        %s429 = sand.u32 %s313, 1
        %s430 = scalar_lea.sflag [#allocation3], %s429
        %s431 = sand.u32 %s313, 1
        %s432 = smul.addr %s431, 16
        %s433 = scalar_lea.vmem [#allocation2], %s432
        %p434 = scmp.lt.s32.totalorder %s27, 1
        %s435 = scalar_select %p434, %s27, 1
        %s436 = smul.addr %s435, 2
        %s437 = smul.addr %s436, 8
        %s438 = scalar_lea.vmem %s0, %s437
        %v440 = vld [vmem:[%s438] sm:$0xff]
        %v441 = vld [vmem:[%s438 + $0x8] sm:$0xff]
        %v442 = vld [vmem:[%s1] sm:$0x1]
        %v443 = vld [vmem:[%s2] sm:$0x1]
        %vm444 = vcmask 261120
        %v445 = vsel %vm444, %v440, 0.0
        %446 = vadd.xlane.f32.xlu0 %v445
        %v447 = vpop.xlane.xlu0 %446
        %v448 = vsel %vm444, %v441, 0.0
        %449 = vadd.xlane.f32.xlu0 %v448
        %v450 = vpop.xlane.xlu0 %449
        %v451 = vrcp.pop 32.0
        %v452 = vmul.f32 %v447, %v451
        %v453 = vmul.f32 %v450, %v451
        %v454 = vmul.f32 %v440, %v440
        %v455 = vmul.f32 %v441, %v441
        %v456 = vsel %vm444, %v454, 0.0
        %457 = vadd.xlane.f32.xlu0 %v456
        %v458 = vpop.xlane.xlu0 %457
        %v459 = vsel %vm444, %v455, 0.0
        %460 = vadd.xlane.f32.xlu0 %v459
        %v461 = vpop.xlane.xlu0 %460
        %v462 = vmul.f32 %v458, %v451
        %v463 = vmul.f32 %v461, %v451
        %v464 = vmul.f32 %v452, %v452
        %v465 = vmul.f32 %v453, %v453
        %v466 = vsub.f32 %v462, %v464
        %v467 = vsub.f32 %v463, %v465
        %v468 = vmax.f32 %v466, 0.0
        %v469 = vmax.f32 %v467, 0.0
        %v470 = vsub.f32 %v440, %v452
        %v471 = vsub.f32 %v441, %v453
        %v472 = vadd.f32 %v468, 1e-05
        %v473 = vadd.f32 %v469, 1e-05
        %v474 = vrsqrt.pop %v472
        %v475 = vrsqrt.pop %v473
        %v476 = vmul.f32 %v470, %v474
        %v477 = vmul.f32 %v471, %v475
        %v479 = vlaneseq
        %v480 = vshrl.u32 %v479, 7
        %v481 = vsub.s32 0, %v480
        %v482 = vrot.slane %v442, %v481
        %v484 = vmul.f32 %v476, %v482
        %v485 = vmul.f32 %v477, %v482
        %v487 = vlaneseq
        %v488 = vshrl.u32 %v487, 7
        %v489 = vsub.s32 0, %v488
        %v490 = vrot.slane %v443, %v489
        %v492 = vadd.f32 %v484, %v490
        %v493 = vadd.f32 %v485, %v490
        %v494 = vpack.c.bf16 %v493, %v492
        %v495 = vlaneseq
        %v496 = vand.u32 %v495, 127
        %vm497 = vcmp.lt.s32.totalorder %v496, 8
        %v498 = vsel %vm497, 0.0, -1e+30
        loop: start=0, step=1, limit=4
        $region73: #{tpu_custom_call.1} parent=71 // loop_pre_header
          _
        $region74: #{tpu_custom_call.1} parent=71 // loop_header
          %s500 = sphi 0, %s504
          %p501 = scmp.ge.s32.totalorder %s500, 4
          %v505 = vphi 0.0, %v753
          %v506 = vphi 0.0, %v754
        $region75: #{tpu_custom_call.1} parent=71 // loop_header_branch
          %503 = sbr.rel (%p501) target = $region79
        $region76: #{tpu_custom_call.1} parent=71 // loop_body
          %s507 = smul.u32 %s500, 4
          %s508 = smul.addr %s507, 4
          %s509 = scalar_lea.vmem %s3, %s508
          %v510 = vld [vmem:[%s509] sm:$0xf]
          %v511 = vld [vmem:[%s509 + $0x4] sm:$0xf]
          %v512 = vld [vmem:[%s509 + $0x8] sm:$0xf]
          %v513 = vld [vmem:[%s509 + $0xc] sm:$0xf]
          %s514 = scalar_lea.vmem %s4, %s500
          %v515 = vld [vmem:[%s514] sm:$0x1]
          %v517 = vlaneseq
          %v518 = vshrl.u32 %v517, 7
          %v519 = vsub.s32 0, %v518
          %v520 = vrot.slane %v515, %v519
          %v526 = vunpack.c.l.b16 %v510
          %v527 = vunpack.c.l.b16 %v511
          %v528 = vunpack.c.l.b16 %v512
          %v529 = vunpack.c.l.b16 %v513
          %v530 = vpack.c.b16 %v527, %v526
          %v531 = vpack.c.b16 %v529, %v528
          %v535 = vsel %vm444, %v494, 0
          %537 = vmatprep.subr.bf16.mxu0 0
          %538 = vmatpush1.bf16.msra.mxu0 %v530
          %539 = vmatprep.subr.bf16.mxu0 0
          %540 = vmatpush1.bf16.msra.mxu0 %v531
          %541 = vmatprep.subr.bf16.mxu0 0
          %542 = vmatpush1.bf16.msra.mxu0 0
          %543 = vmatprep.subr.bf16.mxu0 0
          %544 = vmatpush1.bf16.msra.mxu0 0
          %545 = vmatprep.subr.bf16.mxu0 0
          %546 = vmatpush1.bf16.msra.mxu0 0
          %547 = vmatprep.subr.bf16.mxu0 0
          %548 = vmatpush1.bf16.msra.mxu0 0
          %549 = vmatprep.subr.bf16.mxu0 0
          %550 = vmatpush1.bf16.msra.mxu0 0
          %551 = vmatprep.subr.bf16.mxu0 0
          %552 = vmatpush1.bf16.msra.mxu0 0
          %553 = vmatprep.subr.bf16.mxu0 0
          %554 = vmatpush1.bf16.msra.mxu0 0
          %555 = vmatprep.subr.bf16.mxu0 0
          %556 = vmatpush1.bf16.msra.mxu0 0
          %557 = vmatprep.subr.bf16.mxu0 0
          %558 = vmatpush1.bf16.msra.mxu0 0
          %559 = vmatprep.subr.bf16.mxu0 0
          %560 = vmatpush1.bf16.msra.mxu0 0
          %561 = vmatprep.subr.bf16.mxu0 0
          %562 = vmatpush1.bf16.msra.mxu0 0
          %563 = vmatprep.subr.bf16.mxu0 0
          %564 = vmatpush1.bf16.msra.mxu0 0
          %565 = vmatprep.subr.bf16.mxu0 0
          %566 = vmatpush1.bf16.msra.mxu0 0
          %567 = vmatprep.subr.bf16.mxu0 0
          %568 = vmatpush1.bf16.msra.mxu0 0
          %569 = vmatprep.mubr.bf16.mxu0 0
          %570 = vmatmul.mubr.bf16.gmra.mrb[0].mxu0 %v535
          %v571 = vpop.f32.mrb[0].mxu0
          %v572 = vadd.f32 %v520, %v571
          %v573 = vpop.f32.mrb[0].mxu0
          %v574 = vpop.f32.mrb[0].mxu0
          %v575 = vadd.f32 %v520, %v574
          %v576 = vpop.f32.mrb[0].mxu0
          %577 = vdwg.mxu0
          %v578 = vpack.c.bf16 %v575, %v572
          %580 = vrot.lane.b32.xlu0 %v578, 120
          %v581 = vpop.permute.xlu0 %580
          %vm582 = vcmask 64512
          %v584 = vsel %vm582, %v578, 0
          %v587 = vsel %vm582, %v581, 0
          %589 = vmatprep.subr.bf16.mxu0 0
          %590 = vmatpush1.bf16.xpose.msra.mxu0 %v587
          %591 = vmatprep.subr.bf16.mxu0 0
          %592 = vmatpush1.bf16.xpose.msra.mxu0 0
          %593 = vmatprep.subr.bf16.mxu0 0
          %594 = vmatpush1.bf16.xpose.msra.mxu0 0
          %595 = vmatprep.subr.bf16.mxu0 0
          %596 = vmatpush1.bf16.xpose.msra.mxu0 0
          %597 = vmatprep.subr.bf16.mxu0 0
          %598 = vmatpush1.bf16.xpose.msra.mxu0 0
          %599 = vmatprep.subr.bf16.mxu0 0
          %600 = vmatpush1.bf16.xpose.msra.mxu0 0
          %601 = vmatprep.subr.bf16.mxu0 0
          %602 = vmatpush1.bf16.xpose.msra.mxu0 0
          %603 = vmatprep.subr.bf16.mxu0 0
          %604 = vmatpush1.bf16.xpose.msra.mxu0 0
          %605 = vmatprep.subr.bf16.mxu0 0
          %606 = vmatpush1.bf16.xpose.msra.mxu0 0
          %607 = vmatprep.subr.bf16.mxu0 0
          %608 = vmatpush1.bf16.xpose.msra.mxu0 0
          %609 = vmatprep.subr.bf16.mxu0 0
          %610 = vmatpush1.bf16.xpose.msra.mxu0 0
          %611 = vmatprep.subr.bf16.mxu0 0
          %612 = vmatpush1.bf16.xpose.msra.mxu0 0
          %613 = vmatprep.subr.bf16.mxu0 0
          %614 = vmatpush1.bf16.xpose.msra.mxu0 0
          %615 = vmatprep.subr.bf16.mxu0 0
          %616 = vmatpush1.bf16.xpose.msra.mxu0 0
          %617 = vmatprep.subr.bf16.mxu0 0
          %618 = vmatpush1.bf16.xpose.msra.mxu0 0
          %619 = vmatprep.subr.bf16.mxu0 0
          %620 = vmatpush1.bf16.xpose.msra.mxu0 0
          %621 = vmatprep.mubr.bf16.mxu0 0
          %622 = vmatmul.mubr.bf16.gmra.mrb[0].mxu0 %v584
          %v623 = vpop.f32.mrb[0].mxu0
          %v624 = vadd.f32 %v498, %v623
          %v625 = vpop.f32.mrb[0].mxu0
          %v626 = vpop.f32.mrb[0].mxu0
          %v627 = vadd.f32 %v498, %v626
          %v628 = vpop.f32.mrb[0].mxu0
          %629 = vdwg.mxu0
          %vm630 = vcmask 130048
          %v631 = vsel %vm630, %v624, -inf
          %632 = vmax.xlane.f32.xlu0 %v631
          %v633 = vpop.xlane.xlu0 %632
          %v634 = vsel %vm630, %v627, -inf
          %635 = vmax.xlane.f32.xlu0 %v634
          %v636 = vpop.xlane.xlu0 %635
          %v637 = vsub.f32 %v624, %v633
          %v638 = vsub.f32 %v627, %v636
          %v639 = vmul.f32 %v637, 1.442695
          %v640 = vpow.pop %v639
          %v641 = vmul.f32 %v638, 1.442695
          %v642 = vpow.pop %v641
          %v643 = vsel %vm630, %v640, 0.0
          %644 = vadd.xlane.f32.xlu0 %v643
          %v645 = vpop.xlane.xlu0 %644
          %v646 = vsel %vm630, %v642, 0.0
          %647 = vadd.xlane.f32.xlu0 %v646
          %v648 = vpop.xlane.xlu0 %647
          %v649 = vrcp.pop %v645
          %v650 = vrcp.pop %v648
          %v651 = vpack.c.bf16 %v642, %v640
          %652 = vrot.lane.b32.xlu0 %v578, 112
          %v653 = vpop.permute.xlu0 %652
          %v656 = vsel %vm630, %v651, 0
          %658 = vmatprep.subr.bf16.mxu0 0
          %659 = vmatpush1.bf16.msra.mxu0 %v653
          %660 = vmatprep.subr.bf16.mxu0 0
          %661 = vmatpush1.bf16.msra.mxu0 0
          %662 = vmatprep.subr.bf16.mxu0 0
          %663 = vmatpush1.bf16.msra.mxu0 0
          %664 = vmatprep.subr.bf16.mxu0 0
          %665 = vmatpush1.bf16.msra.mxu0 0
          %666 = vmatprep.subr.bf16.mxu0 0
          %667 = vmatpush1.bf16.msra.mxu0 0
          %668 = vmatprep.subr.bf16.mxu0 0
          %669 = vmatpush1.bf16.msra.mxu0 0
          %670 = vmatprep.subr.bf16.mxu0 0
          %671 = vmatpush1.bf16.msra.mxu0 0
          %672 = vmatprep.subr.bf16.mxu0 0
          %673 = vmatpush1.bf16.msra.mxu0 0
          %674 = vmatprep.subr.bf16.mxu0 0
          %675 = vmatpush1.bf16.msra.mxu0 0
          %676 = vmatprep.subr.bf16.mxu0 0
          %677 = vmatpush1.bf16.msra.mxu0 0
          %678 = vmatprep.subr.bf16.mxu0 0
          %679 = vmatpush1.bf16.msra.mxu0 0
          %680 = vmatprep.subr.bf16.mxu0 0
          %681 = vmatpush1.bf16.msra.mxu0 0
          %682 = vmatprep.subr.bf16.mxu0 0
          %683 = vmatpush1.bf16.msra.mxu0 0
          %684 = vmatprep.subr.bf16.mxu0 0
          %685 = vmatpush1.bf16.msra.mxu0 0
          %686 = vmatprep.subr.bf16.mxu0 0
          %687 = vmatpush1.bf16.msra.mxu0 0
          %688 = vmatprep.subr.bf16.mxu0 0
          %689 = vmatpush1.bf16.msra.mxu0 0
          %690 = vmatprep.mubr.bf16.mxu0 0
          %691 = vmatmul.mubr.bf16.gmra.mrb[0].mxu0 %v656
          %v692 = vpop.f32.mrb[0].mxu0
          %v693 = vadd.f32 0.0, %v692
          %v694 = vpop.f32.mrb[0].mxu0
          %v695 = vpop.f32.mrb[0].mxu0
          %v696 = vadd.f32 0.0, %v695
          %v697 = vpop.f32.mrb[0].mxu0
          %698 = vdwg.mxu0
          %v699 = vmul.f32 %v693, %v649
          %v700 = vmul.f32 %v696, %v650
          %v701 = vpack.c.bf16 %v700, %v699
          %s702 = smul.addr %s500, 4
          %s703 = scalar_lea.vmem %s5, %s702
          %v704 = vld [vmem:[%s703] sm:$0xf]
          %v706 = vsel %vm582, %v701, 0
          %vm708 = vcmask 1043456
          %v710 = vsel %vm708, %v704, 0
          %712 = vmatprep.subr.bf16.mxu0 0
          %713 = vmatpush1.bf16.msra.mxu0 %v710
          %714 = vmatprep.subr.bf16.mxu0 0
          %715 = vmatpush1.bf16.msra.mxu0 0
          %716 = vmatprep.subr.bf16.mxu0 0
          %717 = vmatpush1.bf16.msra.mxu0 0
          %718 = vmatprep.subr.bf16.mxu0 0
          %719 = vmatpush1.bf16.msra.mxu0 0
          %720 = vmatprep.subr.bf16.mxu0 0
          %721 = vmatpush1.bf16.msra.mxu0 0
          %722 = vmatprep.subr.bf16.mxu0 0
          %723 = vmatpush1.bf16.msra.mxu0 0
          %724 = vmatprep.subr.bf16.mxu0 0
          %725 = vmatpush1.bf16.msra.mxu0 0
          %726 = vmatprep.subr.bf16.mxu0 0
          %727 = vmatpush1.bf16.msra.mxu0 0
          %728 = vmatprep.subr.bf16.mxu0 0
          %729 = vmatpush1.bf16.msra.mxu0 0
          %730 = vmatprep.subr.bf16.mxu0 0
          %731 = vmatpush1.bf16.msra.mxu0 0
          %732 = vmatprep.subr.bf16.mxu0 0
          %733 = vmatpush1.bf16.msra.mxu0 0
          %734 = vmatprep.subr.bf16.mxu0 0
          %735 = vmatpush1.bf16.msra.mxu0 0
          %736 = vmatprep.subr.bf16.mxu0 0
          %737 = vmatpush1.bf16.msra.mxu0 0
          %738 = vmatprep.subr.bf16.mxu0 0
          %739 = vmatpush1.bf16.msra.mxu0 0
          %740 = vmatprep.subr.bf16.mxu0 0
          %741 = vmatpush1.bf16.msra.mxu0 0
          %742 = vmatprep.subr.bf16.mxu0 0
          %743 = vmatpush1.bf16.msra.mxu0 0
          %744 = vmatprep.mubr.bf16.mxu0 0
          %745 = vmatmul.mubr.bf16.gmra.mrb[0].mxu0 %v706
          %v746 = vpop.f32.mrb[0].mxu0
          %v747 = vadd.f32 0.0, %v746
          %v748 = vpop.f32.mrb[0].mxu0
          %v749 = vpop.f32.mrb[0].mxu0
          %v750 = vadd.f32 0.0, %v749
          %v751 = vpop.f32.mrb[0].mxu0
          %752 = vdwg.mxu0
          %v753 = vadd.f32 %v505, %v747
          %v754 = vadd.f32 %v506, %v750
        $region77: #{tpu_custom_call.1} parent=71 // loop_footer
          %s504 = sadd.s32 1, %s500
        $region78: #{tpu_custom_call.1} parent=71 // loop_footer_branch
          %499 = sbr.rel target = $region74
        $region79: #{tpu_custom_call.1} parent=71 // loop_exit
          _
        %v755 = vadd.f32 %v440, %v505
        %v756 = vadd.f32 %v441, %v506
        %v757 = vld [vmem:[%s6] sm:$0x1]
        %v759 = vlaneseq
        %v760 = vshrl.u32 %v759, 7
        %v761 = vsub.s32 0, %v760
        %v762 = vrot.slane %v757, %v761
        %v764 = vadd.f32 %v755, %v762
        %v765 = vadd.f32 %v756, %v762
        %v766 = vld [vmem:[%s7] sm:$0x1]
        %v767 = vld [vmem:[%s8] sm:$0x1]
        %v768 = vsel %vm444, %v764, 0.0
        %769 = vadd.xlane.f32.xlu0 %v768
        %v770 = vpop.xlane.xlu0 %769
        %v771 = vsel %vm444, %v765, 0.0
        %772 = vadd.xlane.f32.xlu0 %v771
        %v773 = vpop.xlane.xlu0 %772
        %v774 = vmul.f32 %v770, %v451
        %v775 = vmul.f32 %v773, %v451
        %v776 = vmul.f32 %v764, %v764
        %v777 = vmul.f32 %v765, %v765
        %v778 = vsel %vm444, %v776, 0.0
        %779 = vadd.xlane.f32.xlu0 %v778
        %v780 = vpop.xlane.xlu0 %779
        %v781 = vsel %vm444, %v777, 0.0
        %782 = vadd.xlane.f32.xlu0 %v781
        %v783 = vpop.xlane.xlu0 %782
        %v784 = vmul.f32 %v780, %v451
        %v785 = vmul.f32 %v783, %v451
        %v786 = vmul.f32 %v774, %v774
        %v787 = vmul.f32 %v775, %v775
        %v788 = vsub.f32 %v784, %v786
        %v789 = vsub.f32 %v785, %v787
        %v790 = vmax.f32 %v788, 0.0
        %v791 = vmax.f32 %v789, 0.0
        %v792 = vsub.f32 %v764, %v774
        %v793 = vsub.f32 %v765, %v775
        %v794 = vadd.f32 %v790, 1e-05
        %v795 = vadd.f32 %v791, 1e-05
        %v796 = vrsqrt.pop %v794
        %v797 = vrsqrt.pop %v795
        %v798 = vmul.f32 %v792, %v796
        %v799 = vmul.f32 %v793, %v797
        %v801 = vlaneseq
        %v802 = vshrl.u32 %v801, 7
        %v803 = vsub.s32 0, %v802
        %v804 = vrot.slane %v766, %v803
        %v806 = vmul.f32 %v798, %v804
        %v807 = vmul.f32 %v799, %v804
        %v809 = vlaneseq
        %v810 = vshrl.u32 %v809, 7
        %v811 = vsub.s32 0, %v810
        %v812 = vrot.slane %v767, %v811
        %v814 = vadd.f32 %v806, %v812
        %v815 = vadd.f32 %v807, %v812
        %v816 = vpack.c.bf16 %v815, %v814
        %v817 = vld [vmem:[%s9] sm:$0xf]
        %v818 = vld [vmem:[%s9 + $0x4] sm:$0xf]
        %v819 = vld [vmem:[%s9 + $0x8] sm:$0xf]
        %v820 = vld [vmem:[%s9 + $0xc] sm:$0xf]
        %v821 = vld [vmem:[%s10] sm:$0x1]
        %v823 = vlaneseq
        %v824 = vshrl.u32 %v823, 7
        %v825 = vsub.s32 0, %v824
        %v826 = vrot.slane %v821, %v825
        %v832 = vunpack.c.l.b16 %v817
        %v833 = vunpack.c.l.b16 %v818
        %v834 = vunpack.c.l.b16 %v819
        %v835 = vunpack.c.l.b16 %v820
        %v836 = vpack.c.b16 %v833, %v832
        %v837 = vpack.c.b16 %v835, %v834
        %v841 = vsel %vm444, %v816, 0
        %843 = vmatprep.subr.bf16.mxu0 0
        %844 = vmatpush1.bf16.msra.mxu0 %v836
        %845 = vmatprep.subr.bf16.mxu0 0
        %846 = vmatpush1.bf16.msra.mxu0 %v837
        %847 = vmatprep.subr.bf16.mxu0 0
        %848 = vmatpush1.bf16.msra.mxu0 0
        %849 = vmatprep.subr.bf16.mxu0 0
        %850 = vmatpush1.bf16.msra.mxu0 0
        %851 = vmatprep.subr.bf16.mxu0 0
        %852 = vmatpush1.bf16.msra.mxu0 0
        %853 = vmatprep.subr.bf16.mxu0 0
        %854 = vmatpush1.bf16.msra.mxu0 0
        %855 = vmatprep.subr.bf16.mxu0 0
        %856 = vmatpush1.bf16.msra.mxu0 0
        %857 = vmatprep.subr.bf16.mxu0 0
        %858 = vmatpush1.bf16.msra.mxu0 0
        %859 = vmatprep.subr.bf16.mxu0 0
        %860 = vmatpush1.bf16.msra.mxu0 0
        %861 = vmatprep.subr.bf16.mxu0 0
        %862 = vmatpush1.bf16.msra.mxu0 0
        %863 = vmatprep.subr.bf16.mxu0 0
        %864 = vmatpush1.bf16.msra.mxu0 0
        %865 = vmatprep.subr.bf16.mxu0 0
        %866 = vmatpush1.bf16.msra.mxu0 0
        %867 = vmatprep.subr.bf16.mxu0 0
        %868 = vmatpush1.bf16.msra.mxu0 0
        %869 = vmatprep.subr.bf16.mxu0 0
        %870 = vmatpush1.bf16.msra.mxu0 0
        %871 = vmatprep.subr.bf16.mxu0 0
        %872 = vmatpush1.bf16.msra.mxu0 0
        %873 = vmatprep.subr.bf16.mxu0 0
        %874 = vmatpush1.bf16.msra.mxu0 0
        %875 = vmatprep.mubr.bf16.mxu0 0
        %876 = vmatmul.mubr.bf16.gmra.mrb[0].mxu0 %v841
        %v877 = vpop.f32.mrb[0].mxu0
        %v878 = vadd.f32 %v826, %v877
        %v879 = vpop.f32.mrb[0].mxu0
        %v880 = vpop.f32.mrb[0].mxu0
        %v881 = vadd.f32 %v826, %v880
        %v882 = vpop.f32.mrb[0].mxu0
        %883 = vdwg.mxu0
        %v884 = vmul.f32 %v878, 1.702
        %v885 = vmul.f32 %v881, 1.702
        %v886 = vxor.u32 %v884, 2147483648
        %v887 = vxor.u32 %v885, 2147483648
        %v888 = vmul.f32 %v886, 1.442695
        %v889 = vpow.pop %v888
        %v890 = vmul.f32 %v887, 1.442695
        %v891 = vpow.pop %v890
        %v892 = vadd.f32 %v889, 1.0
        %v893 = vadd.f32 %v891, 1.0
        %v894 = vrcp.pop %v892
        %v895 = vmul.f32 1.0, %v894
        %v896 = vrcp.pop %v893
        %v897 = vmul.f32 1.0, %v896
        %v898 = vmul.f32 %v878, %v895
        %v899 = vmul.f32 %v881, %v897
        %v900 = vpack.c.bf16 %v899, %v898
        %v901 = vld [vmem:[%s11] sm:$0xf]
        %v902 = vld [vmem:[%s11 + $0x4] sm:$0xf]
        %v903 = vld [vmem:[%s11 + $0x8] sm:$0xf]
        %v904 = vld [vmem:[%s11 + $0xc] sm:$0xf]
        %v905 = vld [vmem:[%s11 + $0x10] sm:$0xf]
        %v906 = vld [vmem:[%s11 + $0x14] sm:$0xf]
        %v907 = vld [vmem:[%s11 + $0x18] sm:$0xf]
        %v908 = vld [vmem:[%s11 + $0x1c] sm:$0xf]
        %v909 = vld [vmem:[%s11 + $0x20] sm:$0xf]
        %v910 = vld [vmem:[%s11 + $0x24] sm:$0xf]
        %v911 = vld [vmem:[%s11 + $0x28] sm:$0xf]
        %v912 = vld [vmem:[%s11 + $0x2c] sm:$0xf]
        %v913 = vld [vmem:[%s11 + $0x30] sm:$0xf]
        %v914 = vld [vmem:[%s11 + $0x34] sm:$0xf]
        %v915 = vld [vmem:[%s11 + $0x38] sm:$0xf]
        %v916 = vld [vmem:[%s11 + $0x3c] sm:$0xf]
        %v933 = vunpack.c.l.b16 %v901
        %v934 = vunpack.c.l.b16 %v902
        %v935 = vunpack.c.l.b16 %v903
        %v936 = vunpack.c.l.b16 %v904
        %v937 = vunpack.c.l.b16 %v905
        %v938 = vunpack.c.l.b16 %v906
        %v939 = vunpack.c.l.b16 %v907
        %v940 = vunpack.c.l.b16 %v908
        %v941 = vunpack.c.l.b16 %v909
        %v942 = vunpack.c.l.b16 %v910
        %v943 = vunpack.c.l.b16 %v911
        %v944 = vunpack.c.l.b16 %v912
        %v945 = vunpack.c.l.b16 %v913
        %v946 = vunpack.c.l.b16 %v914
        %v947 = vunpack.c.l.b16 %v915
        %v948 = vunpack.c.l.b16 %v916
        %v949 = vpack.c.b16 %v934, %v933
        %v950 = vpack.c.b16 %v936, %v935
        %v951 = vpack.c.b16 %v938, %v937
        %v952 = vpack.c.b16 %v940, %v939
        %v953 = vpack.c.b16 %v942, %v941
        %v954 = vpack.c.b16 %v944, %v943
        %v955 = vpack.c.b16 %v946, %v945
        %v956 = vpack.c.b16 %v948, %v947
        %965 = vmatprep.subr.bf16.mxu0 0
        %966 = vmatpush1.bf16.msra.mxu0 %v949
        %967 = vmatprep.subr.bf16.mxu0 0
        %968 = vmatpush1.bf16.msra.mxu0 %v950
        %969 = vmatprep.subr.bf16.mxu0 0
        %970 = vmatpush1.bf16.msra.mxu0 %v951
        %971 = vmatprep.subr.bf16.mxu0 0
        %972 = vmatpush1.bf16.msra.mxu0 %v952
        %973 = vmatprep.subr.bf16.mxu0 0
        %974 = vmatpush1.bf16.msra.mxu0 %v953
        %975 = vmatprep.subr.bf16.mxu0 0
        %976 = vmatpush1.bf16.msra.mxu0 %v954
        %977 = vmatprep.subr.bf16.mxu0 0
        %978 = vmatpush1.bf16.msra.mxu0 %v955
        %979 = vmatprep.subr.bf16.mxu0 0
        %980 = vmatpush1.bf16.msra.mxu0 %v956
        %981 = vmatprep.subr.bf16.mxu0 0
        %982 = vmatpush1.bf16.msra.mxu0 0
        %983 = vmatprep.subr.bf16.mxu0 0
        %984 = vmatpush1.bf16.msra.mxu0 0
        %985 = vmatprep.subr.bf16.mxu0 0
        %986 = vmatpush1.bf16.msra.mxu0 0
        %987 = vmatprep.subr.bf16.mxu0 0
        %988 = vmatpush1.bf16.msra.mxu0 0
        %989 = vmatprep.subr.bf16.mxu0 0
        %990 = vmatpush1.bf16.msra.mxu0 0
        %991 = vmatprep.subr.bf16.mxu0 0
        %992 = vmatpush1.bf16.msra.mxu0 0
        %993 = vmatprep.subr.bf16.mxu0 0
        %994 = vmatpush1.bf16.msra.mxu0 0
        %995 = vmatprep.subr.bf16.mxu0 0
        %996 = vmatpush1.bf16.msra.mxu0 0
        %997 = vmatprep.mubr.bf16.mxu0 0
        %998 = vmatmul.mubr.bf16.gmra.mrb[0].mxu0 %v900
        %v999 = vpop.f32.mrb[0].mxu0
        %v1000 = vadd.f32 0.0, %v999
        %v1001 = vpop.f32.mrb[0].mxu0
        %v1002 = vpop.f32.mrb[0].mxu0
        %v1003 = vadd.f32 0.0, %v1002
        %v1004 = vpop.f32.mrb[0].mxu0
        %1005 = vdwg.mxu0
        %v1006 = vadd.f32 %v764, %v1000
        %v1007 = vadd.f32 %v765, %v1003
        %v1008 = vld [vmem:[%s12] sm:$0x1]
        %v1010 = vlaneseq
        %v1011 = vshrl.u32 %v1010, 7
        %v1012 = vsub.s32 0, %v1011
        %v1013 = vrot.slane %v1008, %v1012
        %v1015 = vadd.f32 %v1006, %v1013
        %v1016 = vadd.f32 %v1007, %v1013
        %1017 = vst.msk [vmem:[%s433] sm:$0xff] %vm444, %v1015
        %1018 = vst.msk [vmem:[%s433 + $0x8] sm:$0xff] %vm444, %v1016
        %s1019 = sand.u32 %s313, 1
        %s1020 = scalar_lea.sflag [#allocation3], %s1019
        %s1021 = sand.u32 %s313, 1
        %s1022 = smul.addr %s1021, 16
        %s1023 = scalar_lea.vmem [#allocation2], %s1022
        // Predicated region
        $region80: #{tpu_custom_call.1} parent=71 // pred_check
          %p1024 = pneg %p323
        $region81: #{tpu_custom_call.1} parent=71 // pred_check_branch
          %1026 = sbr.rel (%p1024) target = $region83
        $region82: #{tpu_custom_call.1} parent=71 // pred_region
          %s1028 = ssub.s32 256, 256
          %1029 = vsyncadd %s1020, %s1028
          %s1030 = smul.addr %s27, 2
          %s1031 = smul.addr %s1030, 128
          %s1032 = scalar_lea.hbm %s13, %s1031
          %s1033 = sshll.u32 %s1023, 4
          %s1034 = int_to_ptr.vmem [resolvable:$true] %s1033
          %1039 = dma.vmem_to_hbm [thread:$0]  %s1034, 256, %s1032, %s1020, 128, 128, 8
        $region83: #{tpu_custom_call.1} parent=71 // pred_fallthru
          _
      $region72: #{tpu_custom_call.1} parent=5 // pred_fallthru
        _
      %p1040 = scmp.le.s32.totalorder 2, %s22
      // Predicated region
      $region84: #{tpu_custom_call.1} parent=5 // pred_check
        %p1041 = pneg %p1040
      $region85: #{tpu_custom_call.1} parent=5 // pred_check_branch
        %1043 = sbr.rel (%p1041) target = $region87
      $region86: #{tpu_custom_call.1} parent=5 // pred_region
        %s1044 = ssub.s32 %s22, 2
        // Predicated region
        $region88: #{tpu_custom_call.1} parent=86 // pred_check
          %p1045 = pneg %p329
        $region89: #{tpu_custom_call.1} parent=86 // pred_check_branch
          %1047 = sbr.rel (%p1045) target = $region91
        $region90: #{tpu_custom_call.1} parent=86 // pred_region
          %s1048 = sand.u32 %s314, 1
          %s1049 = scalar_lea.sflag [#allocation3], %s1048
          %s1050 = sand.u32 %s314, 1
          %s1051 = smul.addr %s1050, 16
          %s1052 = scalar_lea.vmem [#allocation2], %s1051
          %1053 = dma.done %s1049, 256
        $region91: #{tpu_custom_call.1} parent=86 // pred_fallthru
          _
      $region87: #{tpu_custom_call.1} parent=5 // pred_fallthru
        _
    $region6: #{tpu_custom_call.1} parent=1 // loop_footer
      %s26 = sadd.s32 1, %s22
    $region7: #{tpu_custom_call.1} parent=1 // loop_footer_branch
      %21 = sbr.rel target = $region3
    $region8: #{tpu_custom_call.1} parent=1 // loop_exit
      _
    %1054 = vsyncpa [#allocation3], 1
    %s1055 = scalar_lea.sflag [#allocation3], 1
    %1056 = vsyncpa %s1055, 1

// kernel: tpu_custom_call.1
$region0: #{tpu_custom_call.1}
  #allocation0 [shape = 'u32[]', space=smem, size = 0x4, offset = 0x4, fixed_abs, tag = 'smem constant byte address 0x4 - core index']
  #allocation1 [shape = 'u32[144,128]{1,0:T(1,128)}', space=vmem, size = 0x12000, scoped, tag = 'internal scratch']
  %s0 = inlined_call_operand.vmem [shape: f32[2,16,32], index: 0, kind: input, shape index: {}]
  %s1 = inlined_call_operand.vmem [shape: f32[1,32], index: 1, kind: input, shape index: {}]
  %s2 = inlined_call_operand.vmem [shape: f32[1,32], index: 2, kind: input, shape index: {}]
  %s3 = inlined_call_operand.vmem [shape: bf16[4,32,24], index: 3, kind: input, shape index: {}]
  %s4 = inlined_call_operand.vmem [shape: f32[4,1,24], index: 4, kind: input, shape index: {}]
  %s5 = inlined_call_operand.vmem [shape: bf16[4,8,32], index: 5, kind: input, shape index: {}]
  %s6 = inlined_call_operand.vmem [shape: f32[1,32], index: 6, kind: input, shape index: {}]
  %s7 = inlined_call_operand.vmem [shape: f32[1,32], index: 7, kind: input, shape index: {}]
  %s8 = inlined_call_operand.vmem [shape: f32[1,32], index: 8, kind: input, shape index: {}]
  %s9 = inlined_call_operand.vmem [shape: bf16[1,32,128], index: 9, kind: input, shape index: {}]
  %s10 = inlined_call_operand.vmem [shape: f32[1,1,128], index: 10, kind: input, shape index: {}]
  %s11 = inlined_call_operand.vmem [shape: bf16[1,128,32], index: 11, kind: input, shape index: {}]
  %s12 = inlined_call_operand.vmem [shape: f32[1,32], index: 12, kind: input, shape index: {}]
  %s13 = inlined_call_operand.hbm [shape: f32[2,16,32], index: 13, kind: output, shape index: {}]
  %s14 = sld [smem:[#allocation0]]
  $region92: #{tpu_custom_call.1} parent=0
    _
  %s16 = ssub.s32 1, %s14
  %s17 = scalar_select 0, %s16, %s14
  $region1: #{tpu_custom_call.1} parent=0
    #allocation2 [shape = 'u8[16384]{0}', space=vmem, size = 0x4000, scoped, tag = 'output window, operand 0']
    #allocation3 [shape = 's32[2]{0}', space=sflag, size = 0x8, scoped, tag = 'scoped memory for tpu_custom_call.1']
    %18 = vsyncpa [#allocation3], 0
    %s19 = scalar_lea.sflag [#allocation3], 1
    %20 = vsyncpa %s19, 0
    loop: start=0, step=1, limit=4
    $region2: #{tpu_custom_call.1} parent=1 // loop_pre_header
      _
    $region3: #{tpu_custom_call.1} parent=1 // loop_header
      %s22 = sphi 0, %s26
      %p23 = scmp.ge.s32.totalorder %s22, 4
      %s32 = sphi 0, %s34
      %s35 = sphi 0, %s32
      %s36 = sphi 0, %s35
      %s52 = sphi 0, %s36
      %s56 = sphi 0, %s56
      %s58 = sphi 0, %s56
      %s59 = sphi 0, %s58
      %s73 = sphi 0, %s59
      %s77 = sphi 0, %s77
      %s79 = sphi 0, %s77
      %s80 = sphi 0, %s79
      %s94 = sphi 0, %s80
      %s98 = sphi 0, %s98
      %s100 = sphi 0, %s98
      %s101 = sphi 0, %s100
      %s115 = sphi 0, %s101
      %s119 = sphi 0, %s119
      %s121 = sphi 0, %s119
      %s122 = sphi 0, %s121
      %s136 = sphi 0, %s122
      %s140 = sphi 0, %s140
      %s142 = sphi 0, %s140
      %s143 = sphi 0, %s142
      %s157 = sphi 0, %s143
      %s161 = sphi 0, %s161
      %s163 = sphi 0, %s161
      %s164 = sphi 0, %s163
      %s178 = sphi 0, %s164
      %s182 = sphi 0, %s182
      %s184 = sphi 0, %s182
      %s185 = sphi 0, %s184
      %s199 = sphi 0, %s185
      %s203 = sphi 0, %s203
      %s205 = sphi 0, %s203
      %s206 = sphi 0, %s205
      %s220 = sphi 0, %s206
      %s224 = sphi 0, %s224
      %s226 = sphi 0, %s224
      %s227 = sphi 0, %s226
      %s241 = sphi 0, %s227
      %s245 = sphi 0, %s245
      %s247 = sphi 0, %s245
      %s248 = sphi 0, %s247
      %s262 = sphi 0, %s248
      %s266 = sphi 0, %s266
      %s268 = sphi 0, %s266
      %s269 = sphi 0, %s268
      %s283 = sphi 0, %s269
      %s287 = sphi 0, %s287
      %s289 = sphi 0, %s287
      %s290 = sphi 0, %s289
      %s304 = sphi 0, %s290
      %s310 = sphi 0, %s312
      %s313 = sphi 0, %s310
      %s314 = sphi 0, %s313
      %s330 = sphi 0, %s314
    $region4: #{tpu_custom_call.1} parent=1 // loop_header_branch
      %25 = sbr.rel (%p23) target = $region8
    $region5: #{tpu_custom_call.1} parent=1 // loop_body
      %s27 = ssub.s32 %s22, 1
      %s28 = ssub.s32 %s22, 2
      %s29 = sadd.s32 %s22, 1
      %s30 = ssub.s32 %s22, %s29
      %p31 = scmp.eq.s32.totalorder %s30, 0
      %s33 = sadd.s32 %s32, 1
      %s34 = scalar_select %p31, %s32, %s33
      %p37 = pneg %p31
      %p38 = scmp.eq.s32.totalorder %s22, 1
      %p39 = por %p37, %p38
      %p40 = scmp.ne.s32.totalorder %s32, %s35
      %p41 = scmp.eq.s32.totalorder %s22, 0
      %p42 = por %p40, %p41
      %p43 = scmp.ne.s32.totalorder %s32, %s35
      %p44 = scmp.eq.s32.totalorder %s27, 1
      %p45 = por %p43, %p44
      %p46 = scmp.ne.s32.totalorder %s35, %s36
      %p47 = scmp.eq.s32.totalorder %s27, 0
      %p48 = por %p46, %p47
      %p49 = scmp.ne.s32.totalorder %s35, %s36
      %p50 = scmp.eq.s32.totalorder %s28, 1
      %p51 = por %p49, %p50
      %p53 = scmp.ne.s32.totalorder %s36, %s52
      %p54 = scmp.eq.s32.totalorder %s28, 0
      %p55 = por %p53, %p54
      %s57 = sadd.s32 %s56, 1
      %p60 = scmp.eq.s32.totalorder %s22, 1
      %p61 = scmp.ne.s32.totalorder %s56, %s58
      %p62 = scmp.eq.s32.totalorder %s22, 0
      %p63 = por %p61, %p62
      %p64 = scmp.ne.s32.totalorder %s56, %s58
      %p65 = scmp.eq.s32.totalorder %s27, 1
      %p66 = por %p64, %p65
      %p67 = scmp.ne.s32.totalorder %s58, %s59
      %p68 = scmp.eq.s32.totalorder %s27, 0
      %p69 = por %p67, %p68
      %p70 = scmp.ne.s32.totalorder %s58, %s59
      %p71 = scmp.eq.s32.totalorder %s28, 1
      %p72 = por %p70, %p71
      %p74 = scmp.ne.s32.totalorder %s59, %s73
      %p75 = scmp.eq.s32.totalorder %s28, 0
      %p76 = por %p74, %p75
      %s78 = sadd.s32 %s77, 1
      %p81 = scmp.eq.s32.totalorder %s22, 1
      %p82 = scmp.ne.s32.totalorder %s77, %s79
      %p83 = scmp.eq.s32.totalorder %s22, 0
      %p84 = por %p82, %p83
      %p85 = scmp.ne.s32.totalorder %s77, %s79
      %p86 = scmp.eq.s32.totalorder %s27, 1
      %p87 = por %p85, %p86
      %p88 = scmp.ne.s32.totalorder %s79, %s80
      %p89 = scmp.eq.s32.totalorder %s27, 0
      %p90 = por %p88, %p89
      %p91 = scmp.ne.s32.totalorder %s79, %s80
      %p92 = scmp.eq.s32.totalorder %s28, 1
      %p93 = por %p91, %p92
      %p95 = scmp.ne.s32.totalorder %s80, %s94
      %p96 = scmp.eq.s32.totalorder %s28, 0
      %p97 = por %p95, %p96
      %s99 = sadd.s32 %s98, 1
      %p102 = scmp.eq.s32.totalorder %s22, 1
      %p103 = scmp.ne.s32.totalorder %s98, %s100
      %p104 = scmp.eq.s32.totalorder %s22, 0
      %p105 = por %p103, %p104
      %p106 = scmp.ne.s32.totalorder %s98, %s100
      %p107 = scmp.eq.s32.totalorder %s27, 1
      %p108 = por %p106, %p107
      %p109 = scmp.ne.s32.totalorder %s100, %s101
      %p110 = scmp.eq.s32.totalorder %s27, 0
      %p111 = por %p109, %p110
      %p112 = scmp.ne.s32.totalorder %s100, %s101
      %p113 = scmp.eq.s32.totalorder %s28, 1
      %p114 = por %p112, %p113
      %p116 = scmp.ne.s32.totalorder %s101, %s115
      %p117 = scmp.eq.s32.totalorder %s28, 0
      %p118 = por %p116, %p117
      %s120 = sadd.s32 %s119, 1
      %p123 = scmp.eq.s32.totalorder %s22, 1
      %p124 = scmp.ne.s32.totalorder %s119, %s121
      %p125 = scmp.eq.s32.totalorder %s22, 0
      %p126 = por %p124, %p125
      %p127 = scmp.ne.s32.totalorder %s119, %s121
      %p128 = scmp.eq.s32.totalorder %s27, 1
      %p129 = por %p127, %p128
      %p130 = scmp.ne.s32.totalorder %s121, %s122
      %p131 = scmp.eq.s32.totalorder %s27, 0
      %p132 = por %p130, %p131
      %p133 = scmp.ne.s32.totalorder %s121, %s122
      %p134 = scmp.eq.s32.totalorder %s28, 1
      %p135 = por %p133, %p134
      %p137 = scmp.ne.s32.totalorder %s122, %s136
      %p138 = scmp.eq.s32.totalorder %s28, 0
      %p139 = por %p137, %p138
      %s141 = sadd.s32 %s140, 1
      %p144 = scmp.eq.s32.totalorder %s22, 1
      %p145 = scmp.ne.s32.totalorder %s140, %s142
      %p146 = scmp.eq.s32.totalorder %s22, 0
      %p147 = por %p145, %p146
      %p148 = scmp.ne.s32.totalorder %s140, %s142
      %p149 = scmp.eq.s32.totalorder %s27, 1
      %p150 = por %p148, %p149
      %p151 = scmp.ne.s32.totalorder %s142, %s143
      %p152 = scmp.eq.s32.totalorder %s27, 0
      %p153 = por %p151, %p152
      %p154 = scmp.ne.s32.totalorder %s142, %s143
      %p155 = scmp.eq.s32.totalorder %s28, 1
      %p156 = por %p154, %p155
      %p158 = scmp.ne.s32.totalorder %s143, %s157
      %p159 = scmp.eq.s32.totalorder %s28, 0
      %p160 = por %p158, %p159
      %s162 = sadd.s32 %s161, 1
      %p165 = scmp.eq.s32.totalorder %s22, 1
      %p166 = scmp.ne.s32.totalorder %s161, %s163
      %p167 = scmp.eq.s32.totalorder %s22, 0
      %p168 = por %p166, %p167
      %p169 = scmp.ne.s32.totalorder %s161, %s163
      %p170 = scmp.eq.s32.totalorder %s27, 1
      %p171 = por %p169, %p170
      %p172 = scmp.ne.s32.totalorder %s163, %s164
      %p173 = scmp.eq.s32.totalorder %s27, 0
      %p174 = por %p172, %p173
      %p175 = scmp.ne.s32.totalorder %s163, %s164
      %p176 = scmp.eq.s32.totalorder %s28, 1
      %p177 = por %p175, %p176
      %p179 = scmp.ne.s32.totalorder %s164, %s178
      %p180 = scmp.eq.s32.totalorder %s28, 0
      %p181 = por %p179, %p180
      %s183 = sadd.s32 %s182, 1
      %p186 = scmp.eq.s32.totalorder %s22, 1
      %p187 = scmp.ne.s32.totalorder %s182, %s184
      %p188 = scmp.eq.s32.totalorder %s22, 0
      %p189 = por %p187, %p188
      %p190 = scmp.ne.s32.totalorder %s182, %s184
      %p191 = scmp.eq.s32.totalorder %s27, 1
      %p192 = por %p190, %p191
      %p193 = scmp.ne.s32.totalorder %s184, %s185
      %p194 = scmp.eq.s32.totalorder %s27, 0
      %p195 = por %p193, %p194
      %p196 = scmp.ne.s32.totalorder %s184, %s185
      %p197 = scmp.eq.s32.totalorder %s28, 1
      %p198 = por %p196, %p197
      %p200 = scmp.ne.s32.totalorder %s185, %s199
      %p201 = scmp.eq.s32.totalorder %s28, 0
      %p202 = por %p200, %p201
      %s204 = sadd.s32 %s203, 1
      %p207 = scmp.eq.s32.totalorder %s22, 1
      %p208 = scmp.ne.s32.totalorder %s203, %s205
      %p209 = scmp.eq.s32.totalorder %s22, 0
      %p210 = por %p208, %p209
      %p211 = scmp.ne.s32.totalorder %s203, %s205
      %p212 = scmp.eq.s32.totalorder %s27, 1
      %p213 = por %p211, %p212
      %p214 = scmp.ne.s32.totalorder %s205, %s206
      %p215 = scmp.eq.s32.totalorder %s27, 0
      %p216 = por %p214, %p215
      %p217 = scmp.ne.s32.totalorder %s205, %s206
      %p218 = scmp.eq.s32.totalorder %s28, 1
      %p219 = por %p217, %p218
      %p221 = scmp.ne.s32.totalorder %s206, %s220
      %p222 = scmp.eq.s32.totalorder %s28, 0
      %p223 = por %p221, %p222
      %s225 = sadd.s32 %s224, 1
      %p228 = scmp.eq.s32.totalorder %s22, 1
      %p229 = scmp.ne.s32.totalorder %s224, %s226
      %p230 = scmp.eq.s32.totalorder %s22, 0
      %p231 = por %p229, %p230
      %p232 = scmp.ne.s32.totalorder %s224, %s226
      %p233 = scmp.eq.s32.totalorder %s27, 1
      %p234 = por %p232, %p233
      %p235 = scmp.ne.s32.totalorder %s226, %s227
      %p236 = scmp.eq.s32.totalorder %s27, 0
      %p237 = por %p235, %p236
      %p238 = scmp.ne.s32.totalorder %s226, %s227
      %p239 = scmp.eq.s32.totalorder %s28, 1
      %p240 = por %p238, %p239
      %p242 = scmp.ne.s32.totalorder %s227, %s241
      %p243 = scmp.eq.s32.totalorder %s28, 0
      %p244 = por %p242, %p243
      %s246 = sadd.s32 %s245, 1
      %p249 = scmp.eq.s32.totalorder %s22, 1
      %p250 = scmp.ne.s32.totalorder %s245, %s247
      %p251 = scmp.eq.s32.totalorder %s22, 0
      %p252 = por %p250, %p251
      %p253 = scmp.ne.s32.totalorder %s245, %s247
      %p254 = scmp.eq.s32.totalorder %s27, 1
      %p255 = por %p253, %p254
      %p256 = scmp.ne.s32.totalorder %s247, %s248
      %p257 = scmp.eq.s32.totalorder %s27, 0
      %p258 = por %p256, %p257
      %p259 = scmp.ne.s32.totalorder %s247, %s248
      %p260 = scmp.eq.s32.totalorder %s28, 1
      %p261 = por %p259, %p260
      %p263 = scmp.ne.s32.totalorder %s248, %s262
      %p264 = scmp.eq.s32.totalorder %s28, 0
      %p265 = por %p263, %p264
      %s267 = sadd.s32 %s266, 1
      %p270 = scmp.eq.s32.totalorder %s22, 1
      %p271 = scmp.ne.s32.totalorder %s266, %s268
      %p272 = scmp.eq.s32.totalorder %s22, 0
      %p273 = por %p271, %p272
      %p274 = scmp.ne.s32.totalorder %s266, %s268
      %p275 = scmp.eq.s32.totalorder %s27, 1
      %p276 = por %p274, %p275
      %p277 = scmp.ne.s32.totalorder %s268, %s269
      %p278 = scmp.eq.s32.totalorder %s27, 0
      %p279 = por %p277, %p278
      %p280 = scmp.ne.s32.totalorder %s268, %s269
      %p281 = scmp.eq.s32.totalorder %s28, 1
      %p282 = por %p280, %p281
      %p284 = scmp.ne.s32.totalorder %s269, %s283
      %p285 = scmp.eq.s32.totalorder %s28, 0
      %p286 = por %p284, %p285
      %s288 = sadd.s32 %s287, 1
      %p291 = scmp.eq.s32.totalorder %s22, 1
      %p292 = scmp.ne.s32.totalorder %s287, %s289
      %p293 = scmp.eq.s32.totalorder %s22, 0
      %p294 = por %p292, %p293
      %p295 = scmp.ne.s32.totalorder %s287, %s289
      %p296 = scmp.eq.s32.totalorder %s27, 1
      %p297 = por %p295, %p296
      %p298 = scmp.ne.s32.totalorder %s289, %s290
      %p299 = scmp.eq.s32.totalorder %s27, 0
      %p300 = por %p298, %p299
      %p301 = scmp.ne.s32.totalorder %s289, %s290
      %p302 = scmp.eq.s32.totalorder %s28, 1
      %p303 = por %p301, %p302
      %p305 = scmp.ne.s32.totalorder %s290, %s304
      %p306 = scmp.eq.s32.totalorder %s28, 0
      %p307 = por %p305, %p306
      %s308 = ssub.s32 %s22, %s29
      %p309 = scmp.eq.s32.totalorder %s308, 0
      %s311 = sadd.s32 %s310, 1
      %s312 = scalar_select %p309, %s310, %s311
      %p315 = pneg %p309
      %p316 = scmp.eq.s32.totalorder %s22, 1
      %p317 = por %p315, %p316
      %p318 = scmp.ne.s32.totalorder %s310, %s313
      %p319 = scmp.eq.s32.totalorder %s22, 0
      %p320 = por %p318, %p319
      %p321 = scmp.ne.s32.totalorder %s310, %s313
      %p322 = scmp.eq.s32.totalorder %s27, 1
      %p323 = por %p321, %p322
      %p324 = scmp.ne.s32.totalorder %s313, %s314
      %p325 = scmp.eq.s32.totalorder %s27, 0
      %p326 = por %p324, %p325
      %p327 = scmp.ne.s32.totalorder %s313, %s314
      %p328 = scmp.eq.s32.totalorder %s28, 1
      %p329 = por %p327, %p328
      %p331 = scmp.ne.s32.totalorder %s314, %s330
      %p332 = scmp.eq.s32.totalorder %s28, 0
      %p333 = por %p331, %p332
      %p334 = scmp.le.s32.totalorder 1, %s22
      %p335 = scmp.lt.s32.totalorder %s22, 3
      %p336 = pnand %p334, %p335
      %p337 = pneg %p336
      // Predicated region
      $region9: #{tpu_custom_call.1} parent=5 // pred_check
        _
      $region10: #{tpu_custom_call.1} parent=5 // pred_check_branch
        %339 = sbr.rel (%p336) target = $region12
      $region11: #{tpu_custom_call.1} parent=5 // pred_region
        %s340 = ssub.s32 %s22, 1
        // Predicated region
        $region13: #{tpu_custom_call.1} parent=11 // pred_check
          %p341 = pneg %p69
        $region14: #{tpu_custom_call.1} parent=11 // pred_check_branch
          %343 = sbr.rel (%p341) target = $region16
        $region15: #{tpu_custom_call.1} parent=11 // pred_region
          _
        $region16: #{tpu_custom_call.1} parent=11 // pred_fallthru
          _
        // Predicated region
        $region17: #{tpu_custom_call.1} parent=11 // pred_check
          %p344 = pneg %p90
        $region18: #{tpu_custom_call.1} parent=11 // pred_check_branch
          %346 = sbr.rel (%p344) target = $region20
        $region19: #{tpu_custom_call.1} parent=11 // pred_region
          _
        $region20: #{tpu_custom_call.1} parent=11 // pred_fallthru
          _
        // Predicated region
        $region21: #{tpu_custom_call.1} parent=11 // pred_check
          %p347 = pneg %p111
        $region22: #{tpu_custom_call.1} parent=11 // pred_check_branch
          %349 = sbr.rel (%p347) target = $region24
        $region23: #{tpu_custom_call.1} parent=11 // pred_region
          _
        $region24: #{tpu_custom_call.1} parent=11 // pred_fallthru
          _
        // Predicated region
        $region25: #{tpu_custom_call.1} parent=11 // pred_check
          %p350 = pneg %p132
        $region26: #{tpu_custom_call.1} parent=11 // pred_check_branch
          %352 = sbr.rel (%p350) target = $region28
        $region27: #{tpu_custom_call.1} parent=11 // pred_region
          _
        $region28: #{tpu_custom_call.1} parent=11 // pred_fallthru
          _
        // Predicated region
        $region29: #{tpu_custom_call.1} parent=11 // pred_check
          %p353 = pneg %p153
        $region30: #{tpu_custom_call.1} parent=11 // pred_check_branch
          %355 = sbr.rel (%p353) target = $region32
        $region31: #{tpu_custom_call.1} parent=11 // pred_region
          _
        $region32: #{tpu_custom_call.1} parent=11 // pred_fallthru
          _
        // Predicated region
        $region33: #{tpu_custom_call.1} parent=11 // pred_check
          %p356 = pneg %p174
        $region34: #{tpu_custom_call.1} parent=11 // pred_check_branch
          %358 = sbr.rel (%p356) target = $region36
        $region35: #{tpu_custom_call.1} parent=11 // pred_region
          _
        $region36: #{tpu_custom_call.1} parent=11 // pred_fallthru
          _
        // Predicated region
        $region37: #{tpu_custom_call.1} parent=11 // pred_check
          %p359 = pneg %p195
        $region38: #{tpu_custom_call.1} parent=11 // pred_check_branch
          %361 = sbr.rel (%p359) target = $region40
        $region39: #{tpu_custom_call.1} parent=11 // pred_region
          _
        $region40: #{tpu_custom_call.1} parent=11 // pred_fallthru
          _
        // Predicated region
        $region41: #{tpu_custom_call.1} parent=11 // pred_check
          %p362 = pneg %p216
        $region42: #{tpu_custom_call.1} parent=11 // pred_check_branch
          %364 = sbr.rel (%p362) target = $region44
        $region43: #{tpu_custom_call.1} parent=11 // pred_region
          _
        $region44: #{tpu_custom_call.1} parent=11 // pred_fallthru
          _
        // Predicated region
        $region45: #{tpu_custom_call.1} parent=11 // pred_check
          %p365 = pneg %p237
        $region46: #{tpu_custom_call.1} parent=11 // pred_check_branch
          %367 = sbr.rel (%p365) target = $region48
        $region47: #{tpu_custom_call.1} parent=11 // pred_region
          _
        $region48: #{tpu_custom_call.1} parent=11 // pred_fallthru
          _
        // Predicated region
        $region49: #{tpu_custom_call.1} parent=11 // pred_check
          %p368 = pneg %p258
        $region50: #{tpu_custom_call.1} parent=11 // pred_check_branch
          %370 = sbr.rel (%p368) target = $region52
        $region51: #{tpu_custom_call.1} parent=11 // pred_region
          _
        $region52: #{tpu_custom_call.1} parent=11 // pred_fallthru
          _
        // Predicated region
        $region53: #{tpu_custom_call.1} parent=11 // pred_check
          %p371 = pneg %p279
        $region54: #{tpu_custom_call.1} parent=11 // pred_check_branch
          %373 = sbr.rel (%p371) target = $region56
        $region55: #{tpu_custom_call.1} parent=11 // pred_region
          _
        $region56: #{tpu_custom_call.1} parent=11 // pred_fallthru
          _
        // Predicated region
        $region57: #{tpu_custom_call.1} parent=11 // pred_check
          %p374 = pneg %p300
        $region58: #{tpu_custom_call.1} parent=11 // pred_check_branch
          %376 = sbr.rel (%p374) target = $region60
        $region59: #{tpu_custom_call.1} parent=11 // pred_region
          _
        $region60: #{tpu_custom_call.1} parent=11 // pred_fallthru
          _
      $region12: #{tpu_custom_call.1} parent=5 // pred_fallthru
        _
      %p377 = scmp.lt.s32.totalorder %s22, 2
      // Predicated region
      $region61: #{tpu_custom_call.1} parent=5 // pred_check
        %p378 = pneg %p377
      $region62: #{tpu_custom_call.1} parent=5 // pred_check_branch
        %380 = sbr.rel (%p378) target = $region64
      $region63: #{tpu_custom_call.1} parent=5 // pred_region
        // Predicated region
        $region65: #{tpu_custom_call.1} parent=63 // pred_check
          %p381 = pneg %p42
        $region66: #{tpu_custom_call.1} parent=63 // pred_check_branch
          %383 = sbr.rel (%p381) target = $region68
        $region67: #{tpu_custom_call.1} parent=63 // pred_region
          %p384 = scmp.lt.s32.totalorder %s22, 1
          %s385 = scalar_select %p384, %s22, 1
          %s386 = smul.addr %s385, 2
          %s387 = smul.addr %s386, 8
          %s388 = scalar_lea.vmem %s0, %s387
        $region68: #{tpu_custom_call.1} parent=63 // pred_fallthru
          _
      $region64: #{tpu_custom_call.1} parent=5 // pred_fallthru
        _
      %p389 = scmp.le.s32.totalorder 1, %s22
      %p390 = scmp.lt.s32.totalorder %s22, 3
      %p391 = pnand %p389, %p390
      %p392 = pneg %p391
      // Predicated region
      $region69: #{tpu_custom_call.1} parent=5 // pred_check
        _
      $region70: #{tpu_custom_call.1} parent=5 // pred_check_branch
        %394 = sbr.rel (%p391) target = $region72
      $region71: #{tpu_custom_call.1} parent=5 // pred_region
        %s395 = ssub.s32 %s22, 1
        %p396 = scmp.lt.s32.totalorder %s27, 1
        %s397 = scalar_select %p396, %s27, 1
        %s398 = smul.addr %s397, 2
        %s399 = smul.addr %s398, 8
        %s400 = scalar_lea.vmem %s0, %s399
        %p401 = pneg %p48
        %p402 = pneg %p45
        %p403 = pneg %p69
        %p404 = pneg %p66
        %p405 = pneg %p90
        %p406 = pneg %p87
        %p407 = pneg %p111
        %p408 = pneg %p108
        %p409 = pneg %p132
        %p410 = pneg %p129
        %p411 = pneg %p153
        %p412 = pneg %p150
        %p413 = pneg %p174
        %p414 = pneg %p171
        %p415 = pneg %p195
        %p416 = pneg %p192
        %p417 = pneg %p216
        %p418 = pneg %p213
        %p419 = pneg %p237
        %p420 = pneg %p234
        %p421 = pneg %p258
        %p422 = pneg %p255
        %p423 = pneg %p279
        %p424 = pneg %p276
        %p425 = pneg %p300
        %p426 = pneg %p297
        %p427 = pneg %p326
        %p428 = pneg %p323
        %s429 = sand.u32 %s313, 1
        %s430 = scalar_lea.sflag [#allocation3], %s429
        %s431 = sand.u32 %s313, 1
        %s432 = smul.addr %s431, 16
        %s433 = scalar_lea.vmem [#allocation2], %s432
        %p434 = scmp.lt.s32.totalorder %s27, 1
        %s435 = scalar_select %p434, %s27, 1
        %s436 = smul.addr %s435, 2
        %s437 = smul.addr %s436, 8
        %s438 = scalar_lea.vmem %s0, %s437
        %v440 = vld [vmem:[%s438] sm:$0xff]
        %v441 = vld [vmem:[%s438 + $0x8] sm:$0xff]
        %v442 = vld [vmem:[%s1] sm:$0x1]
        %v443 = vld [vmem:[%s2] sm:$0x1]
        %vm444 = vcmask 261120
        %v445 = vsel %vm444, %v440, 0.0
        %446 = vadd.xlane.f32.xlu0 %v445
        %v447 = vpop.xlane.xlu0 %446
        %v448 = vsel %vm444, %v441, 0.0
        %449 = vadd.xlane.f32.xlu0 %v448
        %v450 = vpop.xlane.xlu0 %449
        %v451 = vrcp.pop 32.0
        %v452 = vmul.f32 %v447, %v451
        %v453 = vmul.f32 %v450, %v451
        %v454 = vmul.f32 %v440, %v440
        %v455 = vmul.f32 %v441, %v441
        %v456 = vsel %vm444, %v454, 0.0
        %457 = vadd.xlane.f32.xlu0 %v456
        %v458 = vpop.xlane.xlu0 %457
        %v459 = vsel %vm444, %v455, 0.0
        %460 = vadd.xlane.f32.xlu0 %v459
        %v461 = vpop.xlane.xlu0 %460
        %v462 = vmul.f32 %v458, %v451
        %v463 = vmul.f32 %v461, %v451
        %v464 = vmul.f32 %v452, %v452
        %v465 = vmul.f32 %v453, %v453
        %v466 = vsub.f32 %v462, %v464
        %v467 = vsub.f32 %v463, %v465
        %v468 = vmax.f32 %v466, 0.0
        %v469 = vmax.f32 %v467, 0.0
        %v470 = vsub.f32 %v440, %v452
        %v471 = vsub.f32 %v441, %v453
        %v472 = vadd.f32 %v468, 1e-05
        %v473 = vadd.f32 %v469, 1e-05
        %v474 = vrsqrt.pop %v472
        %v475 = vrsqrt.pop %v473
        %v476 = vmul.f32 %v470, %v474
        %v477 = vmul.f32 %v471, %v475
        %v479 = vlaneseq
        %v480 = vshrl.u32 %v479, 7
        %v481 = vsub.s32 0, %v480
        %v482 = vrot.slane %v442, %v481
        %v484 = vmul.f32 %v476, %v482
        %v485 = vmul.f32 %v477, %v482
        %v487 = vlaneseq
        %v488 = vshrl.u32 %v487, 7
        %v489 = vsub.s32 0, %v488
        %v490 = vrot.slane %v443, %v489
        %v492 = vadd.f32 %v484, %v490
        %v493 = vadd.f32 %v485, %v490
        %v494 = vpack.c.bf16 %v493, %v492
        %v495 = vlaneseq
        %v496 = vand.u32 %v495, 127
        %vm497 = vcmp.lt.s32.totalorder %v496, 8
        %v498 = vsel %vm497, 0.0, -1e+30
        loop: start=0, step=1, limit=4
        $region73: #{tpu_custom_call.1} parent=71 // loop_pre_header
          _
        $region74: #{tpu_custom_call.1} parent=71 // loop_header
          %s500 = sphi 0, %s504
          %p501 = scmp.ge.s32.totalorder %s500, 4
          %v505 = vphi 0.0, %v753
          %v506 = vphi 0.0, %v754
        $region75: #{tpu_custom_call.1} parent=71 // loop_header_branch
          %503 = sbr.rel (%p501) target = $region79
        $region76: #{tpu_custom_call.1} parent=71 // loop_body
          %s507 = smul.u32 %s500, 4
          %s508 = smul.addr %s507, 4
          %s509 = scalar_lea.vmem %s3, %s508
          %v510 = vld [vmem:[%s509] sm:$0xf]
          %v511 = vld [vmem:[%s509 + $0x4] sm:$0xf]
          %v512 = vld [vmem:[%s509 + $0x8] sm:$0xf]
          %v513 = vld [vmem:[%s509 + $0xc] sm:$0xf]
          %s514 = scalar_lea.vmem %s4, %s500
          %v515 = vld [vmem:[%s514] sm:$0x1]
          %v517 = vlaneseq
          %v518 = vshrl.u32 %v517, 7
          %v519 = vsub.s32 0, %v518
          %v520 = vrot.slane %v515, %v519
          %v526 = vunpack.c.l.b16 %v510
          %v527 = vunpack.c.l.b16 %v511
          %v528 = vunpack.c.l.b16 %v512
          %v529 = vunpack.c.l.b16 %v513
          %v530 = vpack.c.b16 %v527, %v526
          %v531 = vpack.c.b16 %v529, %v528
          %v535 = vsel %vm444, %v494, 0
          %537 = vmatprep.subr.bf16.mxu0 0
          %538 = vmatpush1.bf16.msra.mxu0 %v530
          %539 = vmatprep.subr.bf16.mxu0 0
          %540 = vmatpush1.bf16.msra.mxu0 %v531
          %541 = vmatprep.subr.bf16.mxu0 0
          %542 = vmatpush1.bf16.msra.mxu0 0
          %543 = vmatprep.subr.bf16.mxu0 0
          %544 = vmatpush1.bf16.msra.mxu0 0
          %545 = vmatprep.subr.bf16.mxu0 0
          %546 = vmatpush1.bf16.msra.mxu0 0
          %547 = vmatprep.subr.bf16.mxu0 0
          %548 = vmatpush1.bf16.msra.mxu0 0
          %549 = vmatprep.subr.bf16.mxu0 0
          %550 = vmatpush1.bf16.msra.mxu0 0
          %551 = vmatprep.subr.bf16.mxu0 0
          %552 = vmatpush1.bf16.msra.mxu0 0
          %553 = vmatprep.subr.bf16.mxu0 0
          %554 = vmatpush1.bf16.msra.mxu0 0
          %555 = vmatprep.subr.bf16.mxu0 0
          %556 = vmatpush1.bf16.msra.mxu0 0
          %557 = vmatprep.subr.bf16.mxu0 0
          %558 = vmatpush1.bf16.msra.mxu0 0
          %559 = vmatprep.subr.bf16.mxu0 0
          %560 = vmatpush1.bf16.msra.mxu0 0
          %561 = vmatprep.subr.bf16.mxu0 0
          %562 = vmatpush1.bf16.msra.mxu0 0
          %563 = vmatprep.subr.bf16.mxu0 0
          %564 = vmatpush1.bf16.msra.mxu0 0
          %565 = vmatprep.subr.bf16.mxu0 0
          %566 = vmatpush1.bf16.msra.mxu0 0
          %567 = vmatprep.subr.bf16.mxu0 0
          %568 = vmatpush1.bf16.msra.mxu0 0
          %569 = vmatprep.mubr.bf16.mxu0 0
          %570 = vmatmul.mubr.bf16.gmra.mrb[0].mxu0 %v535
          %v571 = vpop.f32.mrb[0].mxu0
          %v572 = vadd.f32 %v520, %v571
          %v573 = vpop.f32.mrb[0].mxu0
          %v574 = vpop.f32.mrb[0].mxu0
          %v575 = vadd.f32 %v520, %v574
          %v576 = vpop.f32.mrb[0].mxu0
          %577 = vdwg.mxu0
          %v578 = vpack.c.bf16 %v575, %v572
          %580 = vrot.lane.b32.xlu0 %v578, 120
          %v581 = vpop.permute.xlu0 %580
          %vm582 = vcmask 64512
          %v584 = vsel %vm582, %v578, 0
          %v587 = vsel %vm582, %v581, 0
          %589 = vmatprep.subr.bf16.mxu0 0
          %590 = vmatpush1.bf16.xpose.msra.mxu0 %v587
          %591 = vmatprep.subr.bf16.mxu0 0
          %592 = vmatpush1.bf16.xpose.msra.mxu0 0
          %593 = vmatprep.subr.bf16.mxu0 0
          %594 = vmatpush1.bf16.xpose.msra.mxu0 0
          %595 = vmatprep.subr.bf16.mxu0 0
          %596 = vmatpush1.bf16.xpose.msra.mxu0 0
          %597 = vmatprep.subr.bf16.mxu0 0
          %598 = vmatpush1.bf16.xpose.msra.mxu0 0
          %599 = vmatprep.subr.bf16.mxu0 0
          %600 = vmatpush1.bf16.xpose.msra.mxu0 0
          %601 = vmatprep.subr.bf16.mxu0 0
          %602 = vmatpush1.bf16.xpose.msra.mxu0 0
          %603 = vmatprep.subr.bf16.mxu0 0
          %604 = vmatpush1.bf16.xpose.msra.mxu0 0
          %605 = vmatprep.subr.bf16.mxu0 0
          %606 = vmatpush1.bf16.xpose.msra.mxu0 0
          %607 = vmatprep.subr.bf16.mxu0 0
          %608 = vmatpush1.bf16.xpose.msra.mxu0 0
          %609 = vmatprep.subr.bf16.mxu0 0
          %610 = vmatpush1.bf16.xpose.msra.mxu0 0
          %611 = vmatprep.subr.bf16.mxu0 0
          %612 = vmatpush1.bf16.xpose.msra.mxu0 0
          %613 = vmatprep.subr.bf16.mxu0 0
          %614 = vmatpush1.bf16.xpose.msra.mxu0 0
          %615 = vmatprep.subr.bf16.mxu0 0
          %616 = vmatpush1.bf16.xpose.msra.mxu0 0
          %617 = vmatprep.subr.bf16.mxu0 0
          %618 = vmatpush1.bf16.xpose.msra.mxu0 0
          %619 = vmatprep.subr.bf16.mxu0 0
          %620 = vmatpush1.bf16.xpose.msra.mxu0 0
          %621 = vmatprep.mubr.bf16.mxu0 0
          %622 = vmatmul.mubr.bf16.gmra.mrb[0].mxu0 %v584
          %v623 = vpop.f32.mrb[0].mxu0
          %v624 = vadd.f32 %v498, %v623
          %v625 = vpop.f32.mrb[0].mxu0
          %v626 = vpop.f32.mrb[0].mxu0
          %v627 = vadd.f32 %v498, %v626
          %v628 = vpop.f32.mrb[0].mxu0
          %629 = vdwg.mxu0
          %vm630 = vcmask 130048
          %v631 = vsel %vm630, %v624, -inf
          %632 = vmax.xlane.f32.xlu0 %v631
          %v633 = vpop.xlane.xlu0 %632
          %v634 = vsel %vm630, %v627, -inf
          %635 = vmax.xlane.f32.xlu0 %v634
          %v636 = vpop.xlane.xlu0 %635
          %v637 = vsub.f32 %v624, %v633
          %v638 = vsub.f32 %v627, %v636
          %v639 = vmul.f32 %v637, 1.442695
          %v640 = vpow.pop %v639
          %v641 = vmul.f32 %v638, 1.442695
          %v642 = vpow.pop %v641
          %v643 = vsel %vm630, %v640, 0.0
          %644 = vadd.xlane.f32.xlu0 %v643
          %v645 = vpop.xlane.xlu0 %644
          %v646 = vsel %vm630, %v642, 0.0
          %647 = vadd.xlane.f32.xlu0 %v646
          %v648 = vpop.xlane.xlu0 %647
          %v649 = vrcp.pop %v645
          %v650 = vrcp.pop %v648
          %v651 = vpack.c.bf16 %v642, %v640
          %652 = vrot.lane.b32.xlu0 %v578, 112
          %v653 = vpop.permute.xlu0 %652
          %v656 = vsel %vm630, %v651, 0
          %658 = vmatprep.subr.bf16.mxu0 0
          %659 = vmatpush1.bf16.msra.mxu0 %v653
          %660 = vmatprep.subr.bf16.mxu0 0
          %661 = vmatpush1.bf16.msra.mxu0 0
          %662 = vmatprep.subr.bf16.mxu0 0
          %663 = vmatpush1.bf16.msra.mxu0 0
          %664 = vmatprep.subr.bf16.mxu0 0
          %665 = vmatpush1.bf16.msra.mxu0 0
          %666 = vmatprep.subr.bf16.mxu0 0
          %667 = vmatpush1.bf16.msra.mxu0 0
          %668 = vmatprep.subr.bf16.mxu0 0
          %669 = vmatpush1.bf16.msra.mxu0 0
          %670 = vmatprep.subr.bf16.mxu0 0
          %671 = vmatpush1.bf16.msra.mxu0 0
          %672 = vmatprep.subr.bf16.mxu0 0
          %673 = vmatpush1.bf16.msra.mxu0 0
          %674 = vmatprep.subr.bf16.mxu0 0
          %675 = vmatpush1.bf16.msra.mxu0 0
          %676 = vmatprep.subr.bf16.mxu0 0
          %677 = vmatpush1.bf16.msra.mxu0 0
          %678 = vmatprep.subr.bf16.mxu0 0
          %679 = vmatpush1.bf16.msra.mxu0 0
          %680 = vmatprep.subr.bf16.mxu0 0
          %681 = vmatpush1.bf16.msra.mxu0 0
          %682 = vmatprep.subr.bf16.mxu0 0
          %683 = vmatpush1.bf16.msra.mxu0 0
          %684 = vmatprep.subr.bf16.mxu0 0
          %685 = vmatpush1.bf16.msra.mxu0 0
          %686 = vmatprep.subr.bf16.mxu0 0
          %687 = vmatpush1.bf16.msra.mxu0 0
          %688 = vmatprep.subr.bf16.mxu0 0
          %689 = vmatpush1.bf16.msra.mxu0 0
          %690 = vmatprep.mubr.bf16.mxu0 0
          %691 = vmatmul.mubr.bf16.gmra.mrb[0].mxu0 %v656
          %v692 = vpop.f32.mrb[0].mxu0
          %v693 = vadd.f32 0.0, %v692
          %v694 = vpop.f32.mrb[0].mxu0
          %v695 = vpop.f32.mrb[0].mxu0
          %v696 = vadd.f32 0.0, %v695
          %v697 = vpop.f32.mrb[0].mxu0
          %698 = vdwg.mxu0
          %v699 = vmul.f32 %v693, %v649
          %v700 = vmul.f32 %v696, %v650
          %v701 = vpack.c.bf16 %v700, %v699
          %s702 = smul.addr %s500, 4
          %s703 = scalar_lea.vmem %s5, %s702
          %v704 = vld [vmem:[%s703] sm:$0xf]
          %v706 = vsel %vm582, %v701, 0
          %vm708 = vcmask 1043456
          %v710 = vsel %vm708, %v704, 0
          %712 = vmatprep.subr.bf16.mxu0 0
          %713 = vmatpush1.bf16.msra.mxu0 %v710
          %714 = vmatprep.subr.bf16.mxu0 0
          %715 = vmatpush1.bf16.msra.mxu0 0
          %716 = vmatprep.subr.bf16.mxu0 0
          %717 = vmatpush1.bf16.msra.mxu0 0
          %718 = vmatprep.subr.bf16.mxu0 0
          %719 = vmatpush1.bf16.msra.mxu0 0
          %720 = vmatprep.subr.bf16.mxu0 0
          %721 = vmatpush1.bf16.msra.mxu0 0
          %722 = vmatprep.subr.bf16.mxu0 0
          %723 = vmatpush1.bf16.msra.mxu0 0
          %724 = vmatprep.subr.bf16.mxu0 0
          %725 = vmatpush1.bf16.msra.mxu0 0
          %726 = vmatprep.subr.bf16.mxu0 0
          %727 = vmatpush1.bf16.msra.mxu0 0
          %728 = vmatprep.subr.bf16.mxu0 0
          %729 = vmatpush1.bf16.msra.mxu0 0
          %730 = vmatprep.subr.bf16.mxu0 0
          %731 = vmatpush1.bf16.msra.mxu0 0
          %732 = vmatprep.subr.bf16.mxu0 0
          %733 = vmatpush1.bf16.msra.mxu0 0
          %734 = vmatprep.subr.bf16.mxu0 0
          %735 = vmatpush1.bf16.msra.mxu0 0
          %736 = vmatprep.subr.bf16.mxu0 0
          %737 = vmatpush1.bf16.msra.mxu0 0
          %738 = vmatprep.subr.bf16.mxu0 0
          %739 = vmatpush1.bf16.msra.mxu0 0
          %740 = vmatprep.subr.bf16.mxu0 0
          %741 = vmatpush1.bf16.msra.mxu0 0
          %742 = vmatprep.subr.bf16.mxu0 0
          %743 = vmatpush1.bf16.msra.mxu0 0
          %744 = vmatprep.mubr.bf16.mxu0 0
          %745 = vmatmul.mubr.bf16.gmra.mrb[0].mxu0 %v706
          %v746 = vpop.f32.mrb[0].mxu0
          %v747 = vadd.f32 0.0, %v746
          %v748 = vpop.f32.mrb[0].mxu0
          %v749 = vpop.f32.mrb[0].mxu0
          %v750 = vadd.f32 0.0, %v749
          %v751 = vpop.f32.mrb[0].mxu0
          %752 = vdwg.mxu0
          %v753 = vadd.f32 %v505, %v747
          %v754 = vadd.f32 %v506, %v750
        $region77: #{tpu_custom_call.1} parent=71 // loop_footer
          %s504 = sadd.s32 1, %s500
        $region78: #{tpu_custom_call.1} parent=71 // loop_footer_branch
          %499 = sbr.rel target = $region74
        $region79: #{tpu_custom_call.1} parent=71 // loop_exit
          _
        %v755 = vadd.f32 %v440, %v505
        %v756 = vadd.f32 %v441, %v506
        %v757 = vld [vmem:[%s6] sm:$0x1]
        %v759 = vlaneseq
        %v760 = vshrl.u32 %v759, 7
        %v761 = vsub.s32 0, %v760
        %v762 = vrot.slane %v757, %v761
        %v764 = vadd.f32 %v755, %v762
        %v765 = vadd.f32 %v756, %v762
        %v766 = vld [vmem:[%s7] sm:$0x1]
        %v767 = vld [vmem:[%s8] sm:$0x1]
        %v768 = vsel %vm444, %v764, 0.0
        %769 = vadd.xlane.f32.xlu0 %v768
        %v770 = vpop.xlane.xlu0 %769
        %v771 = vsel %vm444, %v765, 0.0
        %772 = vadd.xlane.f32.xlu0 %v771
        %v773 = vpop.xlane.xlu0 %772
        %v774 = vmul.f32 %v770, %v451
        %v775 = vmul.f32 %v773, %v451
        %v776 = vmul.f32 %v764, %v764
        %v777 = vmul.f32 %v765, %v765
        %v778 = vsel %vm444, %v776, 0.0
        %779 = vadd.xlane.f32.xlu0 %v778
        %v780 = vpop.xlane.xlu0 %779
        %v781 = vsel %vm444, %v777, 0.0
        %782 = vadd.xlane.f32.xlu0 %v781
        %v783 = vpop.xlane.xlu0 %782
        %v784 = vmul.f32 %v780, %v451
        %v785 = vmul.f32 %v783, %v451
        %v786 = vmul.f32 %v774, %v774
        %v787 = vmul.f32 %v775, %v775
        %v788 = vsub.f32 %v784, %v786
        %v789 = vsub.f32 %v785, %v787
        %v790 = vmax.f32 %v788, 0.0
        %v791 = vmax.f32 %v789, 0.0
        %v792 = vsub.f32 %v764, %v774
        %v793 = vsub.f32 %v765, %v775
        %v794 = vadd.f32 %v790, 1e-05
        %v795 = vadd.f32 %v791, 1e-05
        %v796 = vrsqrt.pop %v794
        %v797 = vrsqrt.pop %v795
        %v798 = vmul.f32 %v792, %v796
        %v799 = vmul.f32 %v793, %v797
        %v801 = vlaneseq
        %v802 = vshrl.u32 %v801, 7
        %v803 = vsub.s32 0, %v802
        %v804 = vrot.slane %v766, %v803
        %v806 = vmul.f32 %v798, %v804
        %v807 = vmul.f32 %v799, %v804
        %v809 = vlaneseq
        %v810 = vshrl.u32 %v809, 7
        %v811 = vsub.s32 0, %v810
        %v812 = vrot.slane %v767, %v811
        %v814 = vadd.f32 %v806, %v812
        %v815 = vadd.f32 %v807, %v812
        %v816 = vpack.c.bf16 %v815, %v814
        %v817 = vld [vmem:[%s9] sm:$0xf]
        %v818 = vld [vmem:[%s9 + $0x4] sm:$0xf]
        %v819 = vld [vmem:[%s9 + $0x8] sm:$0xf]
        %v820 = vld [vmem:[%s9 + $0xc] sm:$0xf]
        %v821 = vld [vmem:[%s10] sm:$0x1]
        %v823 = vlaneseq
        %v824 = vshrl.u32 %v823, 7
        %v825 = vsub.s32 0, %v824
        %v826 = vrot.slane %v821, %v825
        %v832 = vunpack.c.l.b16 %v817
        %v833 = vunpack.c.l.b16 %v818
        %v834 = vunpack.c.l.b16 %v819
        %v835 = vunpack.c.l.b16 %v820
        %v836 = vpack.c.b16 %v833, %v832
        %v837 = vpack.c.b16 %v835, %v834
        %v841 = vsel %vm444, %v816, 0
        %843 = vmatprep.subr.bf16.mxu0 0
        %844 = vmatpush1.bf16.msra.mxu0 %v836
        %845 = vmatprep.subr.bf16.mxu0 0
        %846 = vmatpush1.bf16.msra.mxu0 %v837
        %847 = vmatprep.subr.bf16.mxu0 0
        %848 = vmatpush1.bf16.msra.mxu0 0
        %849 = vmatprep.subr.bf16.mxu0 0
        %850 = vmatpush1.bf16.msra.mxu0 0
        %851 = vmatprep.subr.bf16.mxu0 0
        %852 = vmatpush1.bf16.msra.mxu0 0
        %853 = vmatprep.subr.bf16.mxu0 0
        %854 = vmatpush1.bf16.msra.mxu0 0
        %855 = vmatprep.subr.bf16.mxu0 0
        %856 = vmatpush1.bf16.msra.mxu0 0
        %857 = vmatprep.subr.bf16.mxu0 0
        %858 = vmatpush1.bf16.msra.mxu0 0
        %859 = vmatprep.subr.bf16.mxu0 0
        %860 = vmatpush1.bf16.msra.mxu0 0
        %861 = vmatprep.subr.bf16.mxu0 0
        %862 = vmatpush1.bf16.msra.mxu0 0
        %863 = vmatprep.subr.bf16.mxu0 0
        %864 = vmatpush1.bf16.msra.mxu0 0
        %865 = vmatprep.subr.bf16.mxu0 0
        %866 = vmatpush1.bf16.msra.mxu0 0
        %867 = vmatprep.subr.bf16.mxu0 0
        %868 = vmatpush1.bf16.msra.mxu0 0
        %869 = vmatprep.subr.bf16.mxu0 0
        %870 = vmatpush1.bf16.msra.mxu0 0
        %871 = vmatprep.subr.bf16.mxu0 0
        %872 = vmatpush1.bf16.msra.mxu0 0
        %873 = vmatprep.subr.bf16.mxu0 0
        %874 = vmatpush1.bf16.msra.mxu0 0
        %875 = vmatprep.mubr.bf16.mxu0 0
        %876 = vmatmul.mubr.bf16.gmra.mrb[0].mxu0 %v841
        %v877 = vpop.f32.mrb[0].mxu0
        %v878 = vadd.f32 %v826, %v877
        %v879 = vpop.f32.mrb[0].mxu0
        %v880 = vpop.f32.mrb[0].mxu0
        %v881 = vadd.f32 %v826, %v880
        %v882 = vpop.f32.mrb[0].mxu0
        %883 = vdwg.mxu0
        %v884 = vmul.f32 %v878, 1.702
        %v885 = vmul.f32 %v881, 1.702
        %v886 = vxor.u32 %v884, 2147483648
        %v887 = vxor.u32 %v885, 2147483648
        %v888 = vmul.f32 %v886, 1.442695
        %v889 = vpow.pop %v888
        %v890 = vmul.f32 %v887, 1.442695
        %v891 = vpow.pop %v890
        %v892 = vadd.f32 %v889, 1.0
        %v893 = vadd.f32 %v891, 1.0
        %v894 = vrcp.pop %v892
        %v895 = vmul.f32 1.0, %v894
        %v896 = vrcp.pop %v893
        %v897 = vmul.f32 1.0, %v896
        %v898 = vmul.f32 %v878, %v895
        %v899 = vmul.f32 %v881, %v897
        %v900 = vpack.c.bf16 %v899, %v898
        %v901 = vld [vmem:[%s11] sm:$0xf]
        %v902 = vld [vmem:[%s11 + $0x4] sm:$0xf]
        %v903 = vld [vmem:[%s11 + $0x8] sm:$0xf]
        %v904 = vld [vmem:[%s11 + $0xc] sm:$0xf]
        %v905 = vld [vmem:[%s11 + $0x10] sm:$0xf]
        %v906 = vld [vmem:[%s11 + $0x14] sm:$0xf]
        %v907 = vld [vmem:[%s11 + $0x18] sm:$0xf]
        %v908 = vld [vmem:[%s11 + $0x1c] sm:$0xf]
        %v909 = vld [vmem:[%s11 + $0x20] sm:$0xf]
        %v910 = vld [vmem:[%s11 + $0x24] sm:$0xf]
        %v911 = vld [vmem:[%s11 + $0x28] sm:$0xf]
        %v912 = vld [vmem:[%s11 + $0x2c] sm:$0xf]
        %v913 = vld [vmem:[%s11 + $0x30] sm:$0xf]
        %v914 = vld [vmem:[%s11 + $0x34] sm:$0xf]
        %v915 = vld [vmem:[%s11 + $0x38] sm:$0xf]
        %v916 = vld [vmem:[%s11 + $0x3c] sm:$0xf]
        %v933 = vunpack.c.l.b16 %v901
        %v934 = vunpack.c.l.b16 %v902
        %v935 = vunpack.c.l.b16 %v903
        %v936 = vunpack.c.l.b16 %v904
        %v937 = vunpack.c.l.b16 %v905
        %v938 = vunpack.c.l.b16 %v906
        %v939 = vunpack.c.l.b16 %v907
        %v940 = vunpack.c.l.b16 %v908
        %v941 = vunpack.c.l.b16 %v909
        %v942 = vunpack.c.l.b16 %v910
        %v943 = vunpack.c.l.b16 %v911
        %v944 = vunpack.c.l.b16 %v912
        %v945 = vunpack.c.l.b16 %v913
        %v946 = vunpack.c.l.b16 %v914
        %v947 = vunpack.c.l.b16 %v915
        %v948 = vunpack.c.l.b16 %v916
        %v949 = vpack.c.b16 %v934, %v933
        %v950 = vpack.c.b16 %v936, %v935
        %v951 = vpack.c.b16 %v938, %v937
        %v952 = vpack.c.b16 %v940, %v939
        %v953 = vpack.c.b16 %v942, %v941
        %v954 = vpack.c.b16 %v944, %v943
        %v955 = vpack.c.b16 %v946, %v945
        %v956 = vpack.c.b16 %v948, %v947
        %965 = vmatprep.subr.bf16.mxu0 0
        %966 = vmatpush1.bf16.msra.mxu0 %v949
        %967 = vmatprep.subr.bf16.mxu0 0
        %968 = vmatpush1.bf16.msra.mxu0 %v950
        %969 = vmatprep.subr.bf16.mxu0 0
        %970 = vmatpush1.bf16.msra.mxu0 %v951
        %971 = vmatprep.subr.bf16.mxu0 0
        %972 = vmatpush1.bf16.msra.mxu0 %v952
        %973 = vmatprep.subr.bf16.mxu0 0
        %974 = vmatpush1.bf16.msra.mxu0 %v953
        %975 = vmatprep.subr.bf16.mxu0 0
        %976 = vmatpush1.bf16.msra.mxu0 %v954
        %977 = vmatprep.subr.bf16.mxu0 0
        %978 = vmatpush1.bf16.msra.mxu0 %v955
        %979 = vmatprep.subr.bf16.mxu0 0
        %980 = vmatpush1.bf16.msra.mxu0 %v956
        %981 = vmatprep.subr.bf16.mxu0 0
        %982 = vmatpush1.bf16.msra.mxu0 0
        %983 = vmatprep.subr.bf16.mxu0 0
        %984 = vmatpush1.bf16.msra.mxu0 0
        %985 = vmatprep.subr.bf16.mxu0 0
        %986 = vmatpush1.bf16.msra.mxu0 0
        %987 = vmatprep.subr.bf16.mxu0 0
        %988 = vmatpush1.bf16.msra.mxu0 0
        %989 = vmatprep.subr.bf16.mxu0 0
        %990 = vmatpush1.bf16.msra.mxu0 0
        %991 = vmatprep.subr.bf16.mxu0 0
        %992 = vmatpush1.bf16.msra.mxu0 0
        %993 = vmatprep.subr.bf16.mxu0 0
        %994 = vmatpush1.bf16.msra.mxu0 0
        %995 = vmatprep.subr.bf16.mxu0 0
        %996 = vmatpush1.bf16.msra.mxu0 0
        %997 = vmatprep.mubr.bf16.mxu0 0
        %998 = vmatmul.mubr.bf16.gmra.mrb[0].mxu0 %v900
        %v999 = vpop.f32.mrb[0].mxu0
        %v1000 = vadd.f32 0.0, %v999
        %v1001 = vpop.f32.mrb[0].mxu0
        %v1002 = vpop.f32.mrb[0].mxu0
        %v1003 = vadd.f32 0.0, %v1002
        %v1004 = vpop.f32.mrb[0].mxu0
        %1005 = vdwg.mxu0
        %v1006 = vadd.f32 %v764, %v1000
        %v1007 = vadd.f32 %v765, %v1003
        %v1008 = vld [vmem:[%s12] sm:$0x1]
        %v1010 = vlaneseq
        %v1011 = vshrl.u32 %v1010, 7
        %v1012 = vsub.s32 0, %v1011
        %v1013 = vrot.slane %v1008, %v1012
        %v1015 = vadd.f32 %v1006, %v1013
        %v1016 = vadd.f32 %v1007, %v1013
        %1017 = vst.msk [vmem:[%s433] sm:$0xff] %vm444, %v1015
        %1018 = vst.msk [vmem:[%s433 + $0x8] sm:$0xff] %vm444, %v1016
        %s1019 = sand.u32 %s313, 1
        %s1020 = scalar_lea.sflag [#allocation3], %s1019
        %s1021 = sand.u32 %s313, 1
        %s1022 = smul.addr %s1021, 16
        %s1023 = scalar_lea.vmem [#allocation2], %s1022
        // Predicated region
        $region80: #{tpu_custom_call.1} parent=71 // pred_check
          %p1024 = pneg %p323
        $region81: #{tpu_custom_call.1} parent=71 // pred_check_branch
          %1026 = sbr.rel (%p1024) target = $region83
        $region82: #{tpu_custom_call.1} parent=71 // pred_region
          %s1028 = ssub.s32 256, 256
          %1029 = vsyncadd %s1020, %s1028
          %s1030 = smul.addr %s27, 2
          %s1031 = smul.addr %s1030, 128
          %s1032 = scalar_lea.hbm %s13, %s1031
          %s1033 = sshll.u32 %s1023, 4
          %s1034 = int_to_ptr.vmem [resolvable:$true] %s1033
          %1039 = dma.vmem_to_hbm [thread:$0]  %s1034, 256, %s1032, %s1020, 128, 128, 8
        $region83: #{tpu_custom_call.1} parent=71 // pred_fallthru
          _
      $region72: #{tpu_custom_call.1} parent=5 // pred_fallthru
        _
      %p1040 = scmp.le.s32.totalorder 2, %s22
      // Predicated region
      $region84: #{tpu_custom_call.1} parent=5 // pred_check
        %p1041 = pneg %p1040
      $region85: #{tpu_custom_call.1} parent=5 // pred_check_branch
        %1043 = sbr.rel (%p1041) target = $region87
      $region86: #{tpu_custom_call.1} parent=5 // pred_region
        %s1044 = ssub.s32 %s22, 2
        // Predicated region
        $region88: #{tpu_custom_call.1} parent=86 // pred_check
          %p1045 = pneg %p329
        $region89: #{tpu_custom_call.1} parent=86 // pred_check_branch
          %1047 = sbr.rel (%p1045) target = $region91
        $region90: #{tpu_custom_call.1} parent=86 // pred_region
          %s1048 = sand.u32 %s314, 1
          %s1049 = scalar_lea.sflag [#allocation3], %s1048
          %s1050 = sand.u32 %s314, 1
          %s1051 = smul.addr %s1050, 16
          %s1052 = scalar_lea.vmem [#allocation2], %s1051
          %1053 = dma.done %s1049, 256
        $region91: #{tpu_custom_call.1} parent=86 // pred_fallthru
          _
      $region87: #{tpu_custom_call.1} parent=5 // pred_fallthru
        _
    $region6: #{tpu_custom_call.1} parent=1 // loop_footer
      %s26 = sadd.s32 1, %s22
    $region7: #{tpu_custom_call.1} parent=1 // loop_footer_branch
      %21 = sbr.rel target = $region3
    $region8: #{tpu_custom_call.1} parent=1 // loop_exit
      _
    %1054 = vsyncpa [#allocation3], 1
    %s1055 = scalar_lea.sflag [#allocation3], 1
    %1056 = vsyncpa %s1055, 1

</llo_original>
